<compile_context>
chip_gen: v7x
topology: tpu7x:2x2x1
jax: 0.10.0
libtpu: 0.0.40
codegen_flags: <defaults>
</compile_context>

<pallas_src>
import functools

import jax
import jax.numpy as jnp
from jax.experimental import pallas as pl
from jax.experimental.pallas import tpu as pltpu


def _fused_lstm_block_kernel(x_ref, wih_ref, b_ref, whh_ref,
                             out_ref, h_out_ref, c_out_ref,
                             h_sc, c_sc, *, seq_len, t_blk, hidden, b_pad):
    """Runs t_blk LSTM steps per grid invocation, with the input projection fused."""
    blk = pl.program_id(0)
    H = hidden
    G = 4 * H

    # h0 = c0 = 0 (PyTorch default when no (h0, c0) is passed).
    @pl.when(blk == 0)
    def _():
        h_sc[...] = jnp.zeros_like(h_sc)
        c_sc[...] = jnp.zeros_like(c_sc)

    # ---- Fused input projection for the whole time block (one MXU call) ----
    # (t_blk*B_pad, D) @ (D, 4H) + (1, 4H); bf16 operands, f32 accumulate.
    pre = (jnp.dot(x_ref[...], wih_ref[...], preferred_element_type=jnp.float32)
           + b_ref[...])
    pre = pre.reshape(t_blk, b_pad, G)          # sublane-aligned split -> free

    w_hh = whh_ref[...]                         # (H, 4H) bf16; constant index map -> resident
    h = h_sc[...]                               # (B_pad, H) f32 carry
    c = c_sc[...]

    # Lane mask selecting the "g" (cell-candidate, tanh) gate lanes; loop-invariant.
    lane = jax.lax.broadcasted_iota(jnp.int32, (b_pad, G), 1)
    is_g = (lane >= 2 * H) & (lane < 3 * H)

    needs_guard = (seq_len % t_blk) != 0        # static: only if T was padded in time

    for tt in range(t_blk):                     # static unroll of the block recurrence
        # One fused matmul for all four gates: (B_pad, H) @ (H, 4H) -> (B_pad, 4H).
        gates = pre[tt] + jnp.dot(h.astype(w_hh.dtype), w_hh,
                                  preferred_element_type=jnp.float32)
        # Two full-width activations (EUP) instead of four narrow quarter-lane ones;
        # PyTorch gate order along lanes: i, f, g, o.
        act = jnp.where(is_g, jnp.tanh(gates), jax.nn.sigmoid(gates))
        i_g = act[:, 0 * H:1 * H]
        f_g = act[:, 1 * H:2 * H]
        g_g = act[:, 2 * H:3 * H]
        o_g = act[:, 3 * H:4 * H]

        c_new = f_g * c + i_g * g_g
        h_new = o_g * jnp.tanh(c_new)

        if needs_guard:
            # Padded (beyond-seq_len) steps must not advance the state.
            valid = (blk * t_blk + tt) < seq_len
            h_new = jnp.where(valid, h_new, h)
            c_new = jnp.where(valid, c_new, c)

        h, c = h_new, c_new
        # Lane-dense output slab: step tt occupies lanes [tt*H, (tt+1)*H).
        out_ref[0, :, tt * H:(tt + 1) * H] = h.astype(out_ref.dtype)

    h_sc[...] = h
    c_sc[...] = c

    # Only the last grid step materializes h_T / c_T.
    @pl.when(blk == pl.num_programs(0) - 1)
    def _():
        h_out_ref[...] = h.astype(h_out_ref.dtype)
        c_out_ref[...] = c.astype(c_out_ref.dtype)


def encoder_lstm_forward(video_features, weight_ih, weight_hh, bias_ih, bias_hh,
                         *, t_blk=None):
    """Matches EncoderLSTM.forward: returns (outputs, hidden, cell)."""
    B, T, D = video_features.shape
    H = weight_ih.shape[0] // 4
    G = 4 * H
    dtype = video_features.dtype

    if t_blk is None:
        # Short sequences: run the whole recurrence in one grid step (no per-block
        # overhead, needs_guard statically False). Long sequences: block the time axis.
        t_blk = T if T <= 32 else 16
    n_blocks = pl.cdiv(T, t_blk)
    T_pad = n_blocks * t_blk
    B_pad = ((B + 7) // 8) * 8                  # fill sublanes

    # Parameter restack (XLA glue): fused gate layout, PyTorch gate order (i, f, g, o).
    # bf16 MXU operands; combined bias stays f32 (added post-accumulation).
    w_ih = jnp.transpose(weight_ih, (1, 0)).astype(jnp.bfloat16)    # (D, 4H)
    w_hh = jnp.transpose(weight_hh, (1, 0)).astype(jnp.bfloat16)    # (H, 4H)
    bias = (bias_ih + bias_hh).reshape(1, G).astype(jnp.float32)    # (1, 4H)

    # Time-major, batch/time-padded, flattened to rows: (T_pad*B_pad, D), bf16.
    x_tbd = jnp.transpose(video_features, (1, 0, 2))
    x_tbd = jnp.pad(x_tbd, ((0, T_pad - T), (0, B_pad - B), (0, 0)))
    x_rows = x_tbd.reshape(T_pad * B_pad, D).astype(jnp.bfloat16)

    kernel = functools.partial(_fused_lstm_block_kernel,
                               seq_len=T, t_blk=t_blk, hidden=H, b_pad=B_pad)

    out_slab, h_last, c_last = pl.pallas_call(
        kernel,
        out_shape=(
            jax.ShapeDtypeStruct((n_blocks, B_pad, t_blk * H), dtype),  # lane-dense slab
            jax.ShapeDtypeStruct((B_pad, H), dtype),                    # h_T
            jax.ShapeDtypeStruct((B_pad, H), dtype),                    # c_T
        ),
        grid_spec=pltpu.PrefetchScalarGridSpec(
            num_scalar_prefetch=0,
            grid=(n_blocks,),
            in_specs=[
                pl.BlockSpec((t_blk * B_pad, D), lambda t: (t, 0)),  # x rows for this block
                pl.BlockSpec((D, G), lambda t: (0, 0)),              # W_ih (resident)
                pl.BlockSpec((1, G), lambda t: (0, 0)),              # combined bias (resident)
                pl.BlockSpec((H, G), lambda t: (0, 0)),              # W_hh (resident)
            ],
            out_specs=(
                pl.BlockSpec((1, B_pad, t_blk * H), lambda t: (t, 0, 0)),  # output slab
                pl.BlockSpec((B_pad, H), lambda t: (0, 0)),                # h_T (resident)
                pl.BlockSpec((B_pad, H), lambda t: (0, 0)),                # c_T (resident)
            ),
            scratch_shapes=[
                pltpu.VMEM((B_pad, H), jnp.float32),   # h carry across time blocks
                pltpu.VMEM((B_pad, H), jnp.float32),   # c carry across time blocks
            ],
        ),
        compiler_params=pltpu.CompilerParams(
            dimension_semantics=("arbitrary",)),       # recurrence => sequential grid
    )(x_rows, w_ih, bias, w_hh)

    # Undo the lane-dense slab layout: (n_blocks, B_pad, t_blk*H) -> (B, T, H).
    outputs = out_slab.reshape(n_blocks, B_pad, t_blk, H)
    outputs = jnp.transpose(outputs, (1, 0, 2, 3)).reshape(B_pad, T_pad, H)[:B, :T]
    hidden = h_last[:B][None]                          # (num_layers=1, B, H)
    cell = c_last[:B][None]                            # (num_layers=1, B, H)
    return outputs, hidden, cell


def lstm_reference(x, weight_ih, weight_hh, bias_ih, bias_hh):
    """Pure-JAX f32 reference matching torch.nn.LSTM semantics."""
    B, T, D = x.shape
    H = weight_ih.shape[0] // 4

    def step(carry, x_t):
        h, c = carry
        gates = x_t @ weight_ih.T + h @ weight_hh.T + bias_ih + bias_hh
        i, f, g, o = jnp.split(gates, 4, axis=-1)
        c = jax.nn.sigmoid(f) * c + jax.nn.sigmoid(i) * jnp.tanh(g)
        h = jax.nn.sigmoid(o) * jnp.tanh(c)
        return (h, c), h

    init = (jnp.zeros((B, H), x.dtype), jnp.zeros((B, H), x.dtype))
    (h, c), outs = jax.lax.scan(step, init, jnp.transpose(x, (1, 0, 2)))
    return jnp.transpose(outs, (1, 0, 2)), h[None], c[None]


if __name__ == "__main__":
    # batch=2, seq=12, input_size=16, hidden_size=32 (4H = 128 = full lane width).
    B, T, D, H = 2, 12, 16, 32

    key = jax.random.PRNGKey(0)
    k_x, k1, k2, k3, k4 = jax.random.split(key, 5)
    bound = 1.0 / (H ** 0.5)    # PyTorch LSTM init: U(-1/sqrt(H), 1/sqrt(H))

    x = jax.random.normal(k_x, (B, T, D), jnp.float32)
    weight_ih = jax.random.uniform(k1, (4 * H, D), jnp.float32, -bound, bound)
    weight_hh = jax.random.uniform(k2, (4 * H, H), jnp.float32, -bound, bound)
    bias_ih = jax.random.uniform(k3, (4 * H,), jnp.float32, -bound, bound)
    bias_hh = jax.random.uniform(k4, (4 * H,), jnp.float32, -bound, bound)

    ref_out, ref_h, ref_c = lstm_reference(x, weight_ih, weight_hh, bias_ih, bias_hh)

    # Default path: whole recurrence in one grid step (t_blk = T).
    outputs, hidden, cell = jax.block_until_ready(
        encoder_lstm_forward(x, weight_ih, weight_hh, bias_ih, bias_hh))

    assert outputs.shape == (B, T, H)
    assert hidden.shape == (1, B, H)
    assert cell.shape == (1, B, H)
    # bf16 MXU operands -> loosened tolerance vs the f32 reference.
    assert jnp.allclose(outputs, ref_out, atol=5e-2), "outputs mismatch"
    assert jnp.allclose(hidden, ref_h, atol=5e-2), "hidden mismatch"
    assert jnp.allclose(cell, ref_c, atol=5e-2), "cell mismatch"

    # Multi-block path: t_blk=8 does not divide T=12 -> exercises time padding + guard.
    outputs2, hidden2, cell2 = jax.block_until_ready(
        encoder_lstm_forward(x, weight_ih, weight_hh, bias_ih, bias_hh, t_blk=8))
    assert jnp.allclose(outputs2, ref_out, atol=5e-2), "outputs mismatch (blocked)"
    assert jnp.allclose(hidden2, ref_h, atol=5e-2), "hidden mismatch (blocked)"
    assert jnp.allclose(cell2, ref_c, atol=5e-2), "cell mismatch (blocked)"

    print("KERNEL_OK")
</pallas_src>

<mosaic_0001>
module attributes {stable_mosaic.version = 11 : i64} {
  func.func @_fused_lstm_block_kernel(%arg0: i32, %arg1: memref<96x16xbf16, #tpu.memory_space<vmem>>, %arg2: memref<16x128xbf16, #tpu.memory_space<vmem>>, %arg3: memref<1x128xf32, #tpu.memory_space<vmem>>, %arg4: memref<32x128xbf16, #tpu.memory_space<vmem>>, %arg5: memref<1x8x384xf32, #tpu.memory_space<vmem>>, %arg6: memref<8x32xf32, #tpu.memory_space<vmem>>, %arg7: memref<8x32xf32, #tpu.memory_space<vmem>>, %arg8: memref<8x32xf32, #tpu.memory_space<vmem>>, %arg9: memref<8x32xf32, #tpu.memory_space<vmem>>) attributes {dimension_semantics = [#tpu.dimension_semantics<arbitrary>], iteration_bounds = array<i64: 1>, scalar_prefetch = 0 : i64, scratch_operands = 2 : i64, tpu.core_type = #tpu.core_type<tc>, window_params = [{transform_indices = @transform_0, window_bounds = array<i64: 96, 16>}, {pipeline_mode = #tpu.pipeline_mode<synchronous>, transform_indices = @transform_1, window_bounds = array<i64: 16, 128>}, {pipeline_mode = #tpu.pipeline_mode<synchronous>, transform_indices = @transform_2, window_bounds = array<i64: 1, 128>}, {pipeline_mode = #tpu.pipeline_mode<synchronous>, transform_indices = @transform_3, window_bounds = array<i64: 32, 128>}, {transform_indices = @transform_4, window_bounds = array<i64: 1, 8, 384>}, {pipeline_mode = #tpu.pipeline_mode<synchronous>, transform_indices = @transform_5, window_bounds = array<i64: 8, 32>}, {pipeline_mode = #tpu.pipeline_mode<synchronous>, transform_indices = @transform_6, window_bounds = array<i64: 8, 32>}]} {
    %c0_i32 = arith.constant 0 : i32
    %0 = arith.cmpi eq, %arg0, %c0_i32 : i32
    %1 = arith.extui %0 : i1 to i32
    %c0_i32_0 = arith.constant 0 : i32
    %2 = arith.cmpi ne, %1, %c0_i32_0 : i32
    scf.if %2 {
      %cst_67 = arith.constant 0.000000e+00 : f32
      %312 = vector.broadcast %cst_67 : f32 to vector<8x32xf32>
      %c0_68 = arith.constant 0 : index
      %c0_69 = arith.constant 0 : index
      %313 = vector.load %arg8[%c0_68, %c0_69] : memref<8x32xf32, #tpu.memory_space<vmem>>, vector<8x32xf32>
      tpu.vector_store %arg8[%c0_68, %c0_69], %312 {strides = array<i32>} : memref<8x32xf32, #tpu.memory_space<vmem>>, vector<8x32xf32>,
      %cst_70 = arith.constant 0.000000e+00 : f32
      %314 = vector.broadcast %cst_70 : f32 to vector<8x32xf32>
      %c0_71 = arith.constant 0 : index
      %c0_72 = arith.constant 0 : index
      %315 = vector.load %arg9[%c0_71, %c0_72] : memref<8x32xf32, #tpu.memory_space<vmem>>, vector<8x32xf32>
      tpu.vector_store %arg9[%c0_71, %c0_72], %314 {strides = array<i32>} : memref<8x32xf32, #tpu.memory_space<vmem>>, vector<8x32xf32>,
    } else {
    }
    %c0 = arith.constant 0 : index
    %c0_1 = arith.constant 0 : index
    %3 = vector.load %arg1[%c0, %c0_1] : memref<96x16xbf16, #tpu.memory_space<vmem>>, vector<96x16xbf16>
    %c0_2 = arith.constant 0 : index
    %c0_3 = arith.constant 0 : index
    %4 = vector.load %arg2[%c0_2, %c0_3] : memref<16x128xbf16, #tpu.memory_space<vmem>>, vector<16x128xbf16>
    %cst = arith.constant dense<0.000000e+00> : vector<96x128xf32>
    %5 = tpu.matmul %3, %4, %cst {dimension_numbers = #tpu.dot_dimension_numbers<[1], [0], [0], [1], [0, 0, 1, 1], [], []>} : vector<96x16xbf16>, vector<16x128xbf16>, vector<96x128xf32> -> vector<96x128xf32>
    %c0_4 = arith.constant 0 : index
    %c0_5 = arith.constant 0 : index
    %6 = vector.load %arg3[%c0_4, %c0_5] : memref<1x128xf32, #tpu.memory_space<vmem>>, vector<1x128xf32>
    %7 = vector.broadcast %6 : vector<1x128xf32> to vector<96x128xf32>
    %8 = arith.addf %5, %7 : vector<96x128xf32>
    %9 = vector.shape_cast %8 : vector<96x128xf32> to vector<12x8x128xf32>
    %c0_6 = arith.constant 0 : index
    %c0_7 = arith.constant 0 : index
    %10 = vector.load %arg4[%c0_6, %c0_7] : memref<32x128xbf16, #tpu.memory_space<vmem>>, vector<32x128xbf16>
    %c0_8 = arith.constant 0 : index
    %c0_9 = arith.constant 0 : index
    %11 = vector.load %arg8[%c0_8, %c0_9] : memref<8x32xf32, #tpu.memory_space<vmem>>, vector<8x32xf32>
    %c0_10 = arith.constant 0 : index
    %c0_11 = arith.constant 0 : index
    %12 = vector.load %arg9[%c0_10, %c0_11] : memref<8x32xf32, #tpu.memory_space<vmem>>, vector<8x32xf32>
    %13 = tpu.iota {dimensions = array<i32: 1>} : vector<8x128xi32>
    %c64_i32 = arith.constant 64 : i32
    %14 = vector.broadcast %c64_i32 : i32 to vector<8x128xi32>
    %15 = arith.cmpi sge, %13, %14 : vector<8x128xi32>
    %c96_i32 = arith.constant 96 : i32
    %16 = vector.broadcast %c96_i32 : i32 to vector<8x128xi32>
    %17 = arith.cmpi slt, %13, %16 : vector<8x128xi32>
    %18 = arith.andi %15, %17 : vector<8x128xi1>
    %19 = vector.extract_strided_slice %9 {offsets = [0, 0, 0], sizes = [1, 8, 128], strides = [1, 1, 1]} : vector<12x8x128xf32> to vector<1x8x128xf32>
    %20 = vector.shape_cast %19 : vector<1x8x128xf32> to vector<8x128xf32>
    %21 = arith.truncf %11 : vector<8x32xf32> to vector<8x32xbf16>
    %cst_12 = arith.constant dense<0.000000e+00> : vector<8x128xf32>
    %22 = tpu.matmul %21, %10, %cst_12 {dimension_numbers = #tpu.dot_dimension_numbers<[1], [0], [0], [1], [0, 0, 1, 1], [], []>} : vector<8x32xbf16>, vector<32x128xbf16>, vector<8x128xf32> -> vector<8x128xf32>
    %23 = arith.addf %20, %22 : vector<8x128xf32>
    %24 = math.tanh %23 : vector<8x128xf32>
    %25 = arith.negf %23 : vector<8x128xf32>
    %26 = math.exp %25 : vector<8x128xf32>
    %cst_13 = arith.constant 1.000000e+00 : f32
    %27 = vector.broadcast %cst_13 : f32 to vector<8x128xf32>
    %28 = arith.addf %27, %26 : vector<8x128xf32>
    %29 = arith.divf %27, %28 : vector<8x128xf32>
    %30 = arith.select %18, %24, %29 : vector<8x128xi1>, vector<8x128xf32>
    %31 = vector.extract_strided_slice %30 {offsets = [0, 0], sizes = [8, 32], strides = [1, 1]} : vector<8x128xf32> to vector<8x32xf32>
    %32 = vector.extract_strided_slice %30 {offsets = [0, 32], sizes = [8, 32], strides = [1, 1]} : vector<8x128xf32> to vector<8x32xf32>
    %33 = vector.extract_strided_slice %30 {offsets = [0, 64], sizes = [8, 32], strides = [1, 1]} : vector<8x128xf32> to vector<8x32xf32>
    %34 = vector.extract_strided_slice %30 {offsets = [0, 96], sizes = [8, 32], strides = [1, 1]} : vector<8x128xf32> to vector<8x32xf32>
    %35 = arith.mulf %32, %12 : vector<8x32xf32>
    %36 = arith.mulf %31, %33 : vector<8x32xf32>
    %37 = arith.addf %35, %36 : vector<8x32xf32>
    %38 = math.tanh %37 : vector<8x32xf32>
    %39 = arith.mulf %34, %38 : vector<8x32xf32>
    %c0_14 = arith.constant 0 : index
    %c0_15 = arith.constant 0 : index
    %c0_16 = arith.constant 0 : index
    %40 = vector.load %arg5[%c0_14, %c0_15, %c0_16] : memref<1x8x384xf32, #tpu.memory_space<vmem>>, vector<1x8x32xf32>
    %41 = vector.shape_cast %40 : vector<1x8x32xf32> to vector<8x32xf32>
    %42 = vector.shape_cast %39 : vector<8x32xf32> to vector<1x8x32xf32>
    tpu.vector_store %arg5[%c0_14, %c0_15, %c0_16], %42 {strides = array<i32>} : memref<1x8x384xf32, #tpu.memory_space<vmem>>, vector<1x8x32xf32>,
    %43 = vector.extract_strided_slice %9 {offsets = [1, 0, 0], sizes = [1, 8, 128], strides = [1, 1, 1]} : vector<12x8x128xf32> to vector<1x8x128xf32>
    %44 = vector.shape_cast %43 : vector<1x8x128xf32> to vector<8x128xf32>
    %45 = arith.truncf %39 : vector<8x32xf32> to vector<8x32xbf16>
    %cst_17 = arith.constant dense<0.000000e+00> : vector<8x128xf32>
    %46 = tpu.matmul %45, %10, %cst_17 {dimension_numbers = #tpu.dot_dimension_numbers<[1], [0], [0], [1], [0, 0, 1, 1], [], []>} : vector<8x32xbf16>, vector<32x128xbf16>, vector<8x128xf32> -> vector<8x128xf32>
    %47 = arith.addf %44, %46 : vector<8x128xf32>
    %48 = math.tanh %47 : vector<8x128xf32>
    %49 = arith.negf %47 : vector<8x128xf32>
    %50 = math.exp %49 : vector<8x128xf32>
    %cst_18 = arith.constant 1.000000e+00 : f32
    %51 = vector.broadcast %cst_18 : f32 to vector<8x128xf32>
    %52 = arith.addf %51, %50 : vector<8x128xf32>
    %53 = arith.divf %51, %52 : vector<8x128xf32>
    %54 = arith.select %18, %48, %53 : vector<8x128xi1>, vector<8x128xf32>
    %55 = vector.extract_strided_slice %54 {offsets = [0, 0], sizes = [8, 32], strides = [1, 1]} : vector<8x128xf32> to vector<8x32xf32>
    %56 = vector.extract_strided_slice %54 {offsets = [0, 32], sizes = [8, 32], strides = [1, 1]} : vector<8x128xf32> to vector<8x32xf32>
    %57 = vector.extract_strided_slice %54 {offsets = [0, 64], sizes = [8, 32], strides = [1, 1]} : vector<8x128xf32> to vector<8x32xf32>
    %58 = vector.extract_strided_slice %54 {offsets = [0, 96], sizes = [8, 32], strides = [1, 1]} : vector<8x128xf32> to vector<8x32xf32>
    %59 = arith.mulf %56, %37 : vector<8x32xf32>
    %60 = arith.mulf %55, %57 : vector<8x32xf32>
    %61 = arith.addf %59, %60 : vector<8x32xf32>
    %62 = math.tanh %61 : vector<8x32xf32>
    %63 = arith.mulf %58, %62 : vector<8x32xf32>
    %c0_19 = arith.constant 0 : index
    %c0_20 = arith.constant 0 : index
    %c32 = arith.constant 32 : index
    %64 = vector.load %arg5[%c0_19, %c0_20, %c32] : memref<1x8x384xf32, #tpu.memory_space<vmem>>, vector<1x8x32xf32>
    %65 = vector.shape_cast %64 : vector<1x8x32xf32> to vector<8x32xf32>
    %66 = vector.shape_cast %63 : vector<8x32xf32> to vector<1x8x32xf32>
    tpu.vector_store %arg5[%c0_19, %c0_20, %c32], %66 {strides = array<i32>} : memref<1x8x384xf32, #tpu.memory_space<vmem>>, vector<1x8x32xf32>,
    %67 = vector.extract_strided_slice %9 {offsets = [2, 0, 0], sizes = [1, 8, 128], strides = [1, 1, 1]} : vector<12x8x128xf32> to vector<1x8x128xf32>
    %68 = vector.shape_cast %67 : vector<1x8x128xf32> to vector<8x128xf32>
    %69 = arith.truncf %63 : vector<8x32xf32> to vector<8x32xbf16>
    %cst_21 = arith.constant dense<0.000000e+00> : vector<8x128xf32>
    %70 = tpu.matmul %69, %10, %cst_21 {dimension_numbers = #tpu.dot_dimension_numbers<[1], [0], [0], [1], [0, 0, 1, 1], [], []>} : vector<8x32xbf16>, vector<32x128xbf16>, vector<8x128xf32> -> vector<8x128xf32>
    %71 = arith.addf %68, %70 : vector<8x128xf32>
    %72 = math.tanh %71 : vector<8x128xf32>
    %73 = arith.negf %71 : vector<8x128xf32>
    %74 = math.exp %73 : vector<8x128xf32>
    %cst_22 = arith.constant 1.000000e+00 : f32
    %75 = vector.broadcast %cst_22 : f32 to vector<8x128xf32>
    %76 = arith.addf %75, %74 : vector<8x128xf32>
    %77 = arith.divf %75, %76 : vector<8x128xf32>
    %78 = arith.select %18, %72, %77 : vector<8x128xi1>, vector<8x128xf32>
    %79 = vector.extract_strided_slice %78 {offsets = [0, 0], sizes = [8, 32], strides = [1, 1]} : vector<8x128xf32> to vector<8x32xf32>
    %80 = vector.extract_strided_slice %78 {offsets = [0, 32], sizes = [8, 32], strides = [1, 1]} : vector<8x128xf32> to vector<8x32xf32>
    %81 = vector.extract_strided_slice %78 {offsets = [0, 64], sizes = [8, 32], strides = [1, 1]} : vector<8x128xf32> to vector<8x32xf32>
    %82 = vector.extract_strided_slice %78 {offsets = [0, 96], sizes = [8, 32], strides = [1, 1]} : vector<8x128xf32> to vector<8x32xf32>
    %83 = arith.mulf %80, %61 : vector<8x32xf32>
    %84 = arith.mulf %79, %81 : vector<8x32xf32>
    %85 = arith.addf %83, %84 : vector<8x32xf32>
    %86 = math.tanh %85 : vector<8x32xf32>
    %87 = arith.mulf %82, %86 : vector<8x32xf32>
    %c0_23 = arith.constant 0 : index
    %c0_24 = arith.constant 0 : index
    %c64 = arith.constant 64 : index
    %88 = vector.load %arg5[%c0_23, %c0_24, %c64] : memref<1x8x384xf32, #tpu.memory_space<vmem>>, vector<1x8x32xf32>
    %89 = vector.shape_cast %88 : vector<1x8x32xf32> to vector<8x32xf32>
    %90 = vector.shape_cast %87 : vector<8x32xf32> to vector<1x8x32xf32>
    tpu.vector_store %arg5[%c0_23, %c0_24, %c64], %90 {strides = array<i32>} : memref<1x8x384xf32, #tpu.memory_space<vmem>>, vector<1x8x32xf32>,
    %91 = vector.extract_strided_slice %9 {offsets = [3, 0, 0], sizes = [1, 8, 128], strides = [1, 1, 1]} : vector<12x8x128xf32> to vector<1x8x128xf32>
    %92 = vector.shape_cast %91 : vector<1x8x128xf32> to vector<8x128xf32>
    %93 = arith.truncf %87 : vector<8x32xf32> to vector<8x32xbf16>
    %cst_25 = arith.constant dense<0.000000e+00> : vector<8x128xf32>
    %94 = tpu.matmul %93, %10, %cst_25 {dimension_numbers = #tpu.dot_dimension_numbers<[1], [0], [0], [1], [0, 0, 1, 1], [], []>} : vector<8x32xbf16>, vector<32x128xbf16>, vector<8x128xf32> -> vector<8x128xf32>
    %95 = arith.addf %92, %94 : vector<8x128xf32>
    %96 = math.tanh %95 : vector<8x128xf32>
    %97 = arith.negf %95 : vector<8x128xf32>
    %98 = math.exp %97 : vector<8x128xf32>
    %cst_26 = arith.constant 1.000000e+00 : f32
    %99 = vector.broadcast %cst_26 : f32 to vector<8x128xf32>
    %100 = arith.addf %99, %98 : vector<8x128xf32>
    %101 = arith.divf %99, %100 : vector<8x128xf32>
    %102 = arith.select %18, %96, %101 : vector<8x128xi1>, vector<8x128xf32>
    %103 = vector.extract_strided_slice %102 {offsets = [0, 0], sizes = [8, 32], strides = [1, 1]} : vector<8x128xf32> to vector<8x32xf32>
    %104 = vector.extract_strided_slice %102 {offsets = [0, 32], sizes = [8, 32], strides = [1, 1]} : vector<8x128xf32> to vector<8x32xf32>
    %105 = vector.extract_strided_slice %102 {offsets = [0, 64], sizes = [8, 32], strides = [1, 1]} : vector<8x128xf32> to vector<8x32xf32>
    %106 = vector.extract_strided_slice %102 {offsets = [0, 96], sizes = [8, 32], strides = [1, 1]} : vector<8x128xf32> to vector<8x32xf32>
    %107 = arith.mulf %104, %85 : vector<8x32xf32>
    %108 = arith.mulf %103, %105 : vector<8x32xf32>
    %109 = arith.addf %107, %108 : vector<8x32xf32>
    %110 = math.tanh %109 : vector<8x32xf32>
    %111 = arith.mulf %106, %110 : vector<8x32xf32>
    %c0_27 = arith.constant 0 : index
    %c0_28 = arith.constant 0 : index
    %c96 = arith.constant 96 : index
    %112 = vector.load %arg5[%c0_27, %c0_28, %c96] : memref<1x8x384xf32, #tpu.memory_space<vmem>>, vector<1x8x32xf32>
    %113 = vector.shape_cast %112 : vector<1x8x32xf32> to vector<8x32xf32>
    %114 = vector.shape_cast %111 : vector<8x32xf32> to vector<1x8x32xf32>
    tpu.vector_store %arg5[%c0_27, %c0_28, %c96], %114 {strides = array<i32>} : memref<1x8x384xf32, #tpu.memory_space<vmem>>, vector<1x8x32xf32>,
    %115 = vector.extract_strided_slice %9 {offsets = [4, 0, 0], sizes = [1, 8, 128], strides = [1, 1, 1]} : vector<12x8x128xf32> to vector<1x8x128xf32>
    %116 = vector.shape_cast %115 : vector<1x8x128xf32> to vector<8x128xf32>
    %117 = arith.truncf %111 : vector<8x32xf32> to vector<8x32xbf16>
    %cst_29 = arith.constant dense<0.000000e+00> : vector<8x128xf32>
    %118 = tpu.matmul %117, %10, %cst_29 {dimension_numbers = #tpu.dot_dimension_numbers<[1], [0], [0], [1], [0, 0, 1, 1], [], []>} : vector<8x32xbf16>, vector<32x128xbf16>, vector<8x128xf32> -> vector<8x128xf32>
    %119 = arith.addf %116, %118 : vector<8x128xf32>
    %120 = math.tanh %119 : vector<8x128xf32>
    %121 = arith.negf %119 : vector<8x128xf32>
    %122 = math.exp %121 : vector<8x128xf32>
    %cst_30 = arith.constant 1.000000e+00 : f32
    %123 = vector.broadcast %cst_30 : f32 to vector<8x128xf32>
    %124 = arith.addf %123, %122 : vector<8x128xf32>
    %125 = arith.divf %123, %124 : vector<8x128xf32>
    %126 = arith.select %18, %120, %125 : vector<8x128xi1>, vector<8x128xf32>
    %127 = vector.extract_strided_slice %126 {offsets = [0, 0], sizes = [8, 32], strides = [1, 1]} : vector<8x128xf32> to vector<8x32xf32>
    %128 = vector.extract_strided_slice %126 {offsets = [0, 32], sizes = [8, 32], strides = [1, 1]} : vector<8x128xf32> to vector<8x32xf32>
    %129 = vector.extract_strided_slice %126 {offsets = [0, 64], sizes = [8, 32], strides = [1, 1]} : vector<8x128xf32> to vector<8x32xf32>
    %130 = vector.extract_strided_slice %126 {offsets = [0, 96], sizes = [8, 32], strides = [1, 1]} : vector<8x128xf32> to vector<8x32xf32>
    %131 = arith.mulf %128, %109 : vector<8x32xf32>
    %132 = arith.mulf %127, %129 : vector<8x32xf32>
    %133 = arith.addf %131, %132 : vector<8x32xf32>
    %134 = math.tanh %133 : vector<8x32xf32>
    %135 = arith.mulf %130, %134 : vector<8x32xf32>
    %c0_31 = arith.constant 0 : index
    %c0_32 = arith.constant 0 : index
    %c128 = arith.constant 128 : index
    %136 = vector.load %arg5[%c0_31, %c0_32, %c128] : memref<1x8x384xf32, #tpu.memory_space<vmem>>, vector<1x8x32xf32>
    %137 = vector.shape_cast %136 : vector<1x8x32xf32> to vector<8x32xf32>
    %138 = vector.shape_cast %135 : vector<8x32xf32> to vector<1x8x32xf32>
    tpu.vector_store %arg5[%c0_31, %c0_32, %c128], %138 {strides = array<i32>} : memref<1x8x384xf32, #tpu.memory_space<vmem>>, vector<1x8x32xf32>,
    %139 = vector.extract_strided_slice %9 {offsets = [5, 0, 0], sizes = [1, 8, 128], strides = [1, 1, 1]} : vector<12x8x128xf32> to vector<1x8x128xf32>
    %140 = vector.shape_cast %139 : vector<1x8x128xf32> to vector<8x128xf32>
    %141 = arith.truncf %135 : vector<8x32xf32> to vector<8x32xbf16>
    %cst_33 = arith.constant dense<0.000000e+00> : vector<8x128xf32>
    %142 = tpu.matmul %141, %10, %cst_33 {dimension_numbers = #tpu.dot_dimension_numbers<[1], [0], [0], [1], [0, 0, 1, 1], [], []>} : vector<8x32xbf16>, vector<32x128xbf16>, vector<8x128xf32> -> vector<8x128xf32>
    %143 = arith.addf %140, %142 : vector<8x128xf32>
    %144 = math.tanh %143 : vector<8x128xf32>
    %145 = arith.negf %143 : vector<8x128xf32>
    %146 = math.exp %145 : vector<8x128xf32>
    %cst_34 = arith.constant 1.000000e+00 : f32
    %147 = vector.broadcast %cst_34 : f32 to vector<8x128xf32>
    %148 = arith.addf %147, %146 : vector<8x128xf32>
    %149 = arith.divf %147, %148 : vector<8x128xf32>
    %150 = arith.select %18, %144, %149 : vector<8x128xi1>, vector<8x128xf32>
    %151 = vector.extract_strided_slice %150 {offsets = [0, 0], sizes = [8, 32], strides = [1, 1]} : vector<8x128xf32> to vector<8x32xf32>
    %152 = vector.extract_strided_slice %150 {offsets = [0, 32], sizes = [8, 32], strides = [1, 1]} : vector<8x128xf32> to vector<8x32xf32>
    %153 = vector.extract_strided_slice %150 {offsets = [0, 64], sizes = [8, 32], strides = [1, 1]} : vector<8x128xf32> to vector<8x32xf32>
    %154 = vector.extract_strided_slice %150 {offsets = [0, 96], sizes = [8, 32], strides = [1, 1]} : vector<8x128xf32> to vector<8x32xf32>
    %155 = arith.mulf %152, %133 : vector<8x32xf32>
    %156 = arith.mulf %151, %153 : vector<8x32xf32>
    %157 = arith.addf %155, %156 : vector<8x32xf32>
    %158 = math.tanh %157 : vector<8x32xf32>
    %159 = arith.mulf %154, %158 : vector<8x32xf32>
    %c0_35 = arith.constant 0 : index
    %c0_36 = arith.constant 0 : index
    %c160 = arith.constant 160 : index
    %160 = vector.load %arg5[%c0_35, %c0_36, %c160] : memref<1x8x384xf32, #tpu.memory_space<vmem>>, vector<1x8x32xf32>
    %161 = vector.shape_cast %160 : vector<1x8x32xf32> to vector<8x32xf32>
    %162 = vector.shape_cast %159 : vector<8x32xf32> to vector<1x8x32xf32>
    tpu.vector_store %arg5[%c0_35, %c0_36, %c160], %162 {strides = array<i32>} : memref<1x8x384xf32, #tpu.memory_space<vmem>>, vector<1x8x32xf32>,
    %163 = vector.extract_strided_slice %9 {offsets = [6, 0, 0], sizes = [1, 8, 128], strides = [1, 1, 1]} : vector<12x8x128xf32> to vector<1x8x128xf32>
    %164 = vector.shape_cast %163 : vector<1x8x128xf32> to vector<8x128xf32>
    %165 = arith.truncf %159 : vector<8x32xf32> to vector<8x32xbf16>
    %cst_37 = arith.constant dense<0.000000e+00> : vector<8x128xf32>
    %166 = tpu.matmul %165, %10, %cst_37 {dimension_numbers = #tpu.dot_dimension_numbers<[1], [0], [0], [1], [0, 0, 1, 1], [], []>} : vector<8x32xbf16>, vector<32x128xbf16>, vector<8x128xf32> -> vector<8x128xf32>
    %167 = arith.addf %164, %166 : vector<8x128xf32>
    %168 = math.tanh %167 : vector<8x128xf32>
    %169 = arith.negf %167 : vector<8x128xf32>
    %170 = math.exp %169 : vector<8x128xf32>
    %cst_38 = arith.constant 1.000000e+00 : f32
    %171 = vector.broadcast %cst_38 : f32 to vector<8x128xf32>
    %172 = arith.addf %171, %170 : vector<8x128xf32>
    %173 = arith.divf %171, %172 : vector<8x128xf32>
    %174 = arith.select %18, %168, %173 : vector<8x128xi1>, vector<8x128xf32>
    %175 = vector.extract_strided_slice %174 {offsets = [0, 0], sizes = [8, 32], strides = [1, 1]} : vector<8x128xf32> to vector<8x32xf32>
    %176 = vector.extract_strided_slice %174 {offsets = [0, 32], sizes = [8, 32], strides = [1, 1]} : vector<8x128xf32> to vector<8x32xf32>
    %177 = vector.extract_strided_slice %174 {offsets = [0, 64], sizes = [8, 32], strides = [1, 1]} : vector<8x128xf32> to vector<8x32xf32>
    %178 = vector.extract_strided_slice %174 {offsets = [0, 96], sizes = [8, 32], strides = [1, 1]} : vector<8x128xf32> to vector<8x32xf32>
    %179 = arith.mulf %176, %157 : vector<8x32xf32>
    %180 = arith.mulf %175, %177 : vector<8x32xf32>
    %181 = arith.addf %179, %180 : vector<8x32xf32>
    %182 = math.tanh %181 : vector<8x32xf32>
    %183 = arith.mulf %178, %182 : vector<8x32xf32>
    %c0_39 = arith.constant 0 : index
    %c0_40 = arith.constant 0 : index
    %c192 = arith.constant 192 : index
    %184 = vector.load %arg5[%c0_39, %c0_40, %c192] : memref<1x8x384xf32, #tpu.memory_space<vmem>>, vector<1x8x32xf32>
    %185 = vector.shape_cast %184 : vector<1x8x32xf32> to vector<8x32xf32>
    %186 = vector.shape_cast %183 : vector<8x32xf32> to vector<1x8x32xf32>
    tpu.vector_store %arg5[%c0_39, %c0_40, %c192], %186 {strides = array<i32>} : memref<1x8x384xf32, #tpu.memory_space<vmem>>, vector<1x8x32xf32>,
    %187 = vector.extract_strided_slice %9 {offsets = [7, 0, 0], sizes = [1, 8, 128], strides = [1, 1, 1]} : vector<12x8x128xf32> to vector<1x8x128xf32>
    %188 = vector.shape_cast %187 : vector<1x8x128xf32> to vector<8x128xf32>
    %189 = arith.truncf %183 : vector<8x32xf32> to vector<8x32xbf16>
    %cst_41 = arith.constant dense<0.000000e+00> : vector<8x128xf32>
    %190 = tpu.matmul %189, %10, %cst_41 {dimension_numbers = #tpu.dot_dimension_numbers<[1], [0], [0], [1], [0, 0, 1, 1], [], []>} : vector<8x32xbf16>, vector<32x128xbf16>, vector<8x128xf32> -> vector<8x128xf32>
    %191 = arith.addf %188, %190 : vector<8x128xf32>
    %192 = math.tanh %191 : vector<8x128xf32>
    %193 = arith.negf %191 : vector<8x128xf32>
    %194 = math.exp %193 : vector<8x128xf32>
    %cst_42 = arith.constant 1.000000e+00 : f32
    %195 = vector.broadcast %cst_42 : f32 to vector<8x128xf32>
    %196 = arith.addf %195, %194 : vector<8x128xf32>
    %197 = arith.divf %195, %196 : vector<8x128xf32>
    %198 = arith.select %18, %192, %197 : vector<8x128xi1>, vector<8x128xf32>
    %199 = vector.extract_strided_slice %198 {offsets = [0, 0], sizes = [8, 32], strides = [1, 1]} : vector<8x128xf32> to vector<8x32xf32>
    %200 = vector.extract_strided_slice %198 {offsets = [0, 32], sizes = [8, 32], strides = [1, 1]} : vector<8x128xf32> to vector<8x32xf32>
    %201 = vector.extract_strided_slice %198 {offsets = [0, 64], sizes = [8, 32], strides = [1, 1]} : vector<8x128xf32> to vector<8x32xf32>
    %202 = vector.extract_strided_slice %198 {offsets = [0, 96], sizes = [8, 32], strides = [1, 1]} : vector<8x128xf32> to vector<8x32xf32>
    %203 = arith.mulf %200, %181 : vector<8x32xf32>
    %204 = arith.mulf %199, %201 : vector<8x32xf32>
    %205 = arith.addf %203, %204 : vector<8x32xf32>
    %206 = math.tanh %205 : vector<8x32xf32>
    %207 = arith.mulf %202, %206 : vector<8x32xf32>
    %c0_43 = arith.constant 0 : index
    %c0_44 = arith.constant 0 : index
    %c224 = arith.constant 224 : index
    %208 = vector.load %arg5[%c0_43, %c0_44, %c224] : memref<1x8x384xf32, #tpu.memory_space<vmem>>, vector<1x8x32xf32>
    %209 = vector.shape_cast %208 : vector<1x8x32xf32> to vector<8x32xf32>
    %210 = vector.shape_cast %207 : vector<8x32xf32> to vector<1x8x32xf32>
    tpu.vector_store %arg5[%c0_43, %c0_44, %c224], %210 {strides = array<i32>} : memref<1x8x384xf32, #tpu.memory_space<vmem>>, vector<1x8x32xf32>,
    %211 = vector.extract_strided_slice %9 {offsets = [8, 0, 0], sizes = [1, 8, 128], strides = [1, 1, 1]} : vector<12x8x128xf32> to vector<1x8x128xf32>
    %212 = vector.shape_cast %211 : vector<1x8x128xf32> to vector<8x128xf32>
    %213 = arith.truncf %207 : vector<8x32xf32> to vector<8x32xbf16>
    %cst_45 = arith.constant dense<0.000000e+00> : vector<8x128xf32>
    %214 = tpu.matmul %213, %10, %cst_45 {dimension_numbers = #tpu.dot_dimension_numbers<[1], [0], [0], [1], [0, 0, 1, 1], [], []>} : vector<8x32xbf16>, vector<32x128xbf16>, vector<8x128xf32> -> vector<8x128xf32>
    %215 = arith.addf %212, %214 : vector<8x128xf32>
    %216 = math.tanh %215 : vector<8x128xf32>
    %217 = arith.negf %215 : vector<8x128xf32>
    %218 = math.exp %217 : vector<8x128xf32>
    %cst_46 = arith.constant 1.000000e+00 : f32
    %219 = vector.broadcast %cst_46 : f32 to vector<8x128xf32>
    %220 = arith.addf %219, %218 : vector<8x128xf32>
    %221 = arith.divf %219, %220 : vector<8x128xf32>
    %222 = arith.select %18, %216, %221 : vector<8x128xi1>, vector<8x128xf32>
    %223 = vector.extract_strided_slice %222 {offsets = [0, 0], sizes = [8, 32], strides = [1, 1]} : vector<8x128xf32> to vector<8x32xf32>
    %224 = vector.extract_strided_slice %222 {offsets = [0, 32], sizes = [8, 32], strides = [1, 1]} : vector<8x128xf32> to vector<8x32xf32>
    %225 = vector.extract_strided_slice %222 {offsets = [0, 64], sizes = [8, 32], strides = [1, 1]} : vector<8x128xf32> to vector<8x32xf32>
    %226 = vector.extract_strided_slice %222 {offsets = [0, 96], sizes = [8, 32], strides = [1, 1]} : vector<8x128xf32> to vector<8x32xf32>
    %227 = arith.mulf %224, %205 : vector<8x32xf32>
    %228 = arith.mulf %223, %225 : vector<8x32xf32>
    %229 = arith.addf %227, %228 : vector<8x32xf32>
    %230 = math.tanh %229 : vector<8x32xf32>
    %231 = arith.mulf %226, %230 : vector<8x32xf32>
    %c0_47 = arith.constant 0 : index
    %c0_48 = arith.constant 0 : index
    %c256 = arith.constant 256 : index
    %232 = vector.load %arg5[%c0_47, %c0_48, %c256] : memref<1x8x384xf32, #tpu.memory_space<vmem>>, vector<1x8x32xf32>
    %233 = vector.shape_cast %232 : vector<1x8x32xf32> to vector<8x32xf32>
    %234 = vector.shape_cast %231 : vector<8x32xf32> to vector<1x8x32xf32>
    tpu.vector_store %arg5[%c0_47, %c0_48, %c256], %234 {strides = array<i32>} : memref<1x8x384xf32, #tpu.memory_space<vmem>>, vector<1x8x32xf32>,
    %235 = vector.extract_strided_slice %9 {offsets = [9, 0, 0], sizes = [1, 8, 128], strides = [1, 1, 1]} : vector<12x8x128xf32> to vector<1x8x128xf32>
    %236 = vector.shape_cast %235 : vector<1x8x128xf32> to vector<8x128xf32>
    %237 = arith.truncf %231 : vector<8x32xf32> to vector<8x32xbf16>
    %cst_49 = arith.constant dense<0.000000e+00> : vector<8x128xf32>
    %238 = tpu.matmul %237, %10, %cst_49 {dimension_numbers = #tpu.dot_dimension_numbers<[1], [0], [0], [1], [0, 0, 1, 1], [], []>} : vector<8x32xbf16>, vector<32x128xbf16>, vector<8x128xf32> -> vector<8x128xf32>
    %239 = arith.addf %236, %238 : vector<8x128xf32>
    %240 = math.tanh %239 : vector<8x128xf32>
    %241 = arith.negf %239 : vector<8x128xf32>
    %242 = math.exp %241 : vector<8x128xf32>
    %cst_50 = arith.constant 1.000000e+00 : f32
    %243 = vector.broadcast %cst_50 : f32 to vector<8x128xf32>
    %244 = arith.addf %243, %242 : vector<8x128xf32>
    %245 = arith.divf %243, %244 : vector<8x128xf32>
    %246 = arith.select %18, %240, %245 : vector<8x128xi1>, vector<8x128xf32>
    %247 = vector.extract_strided_slice %246 {offsets = [0, 0], sizes = [8, 32], strides = [1, 1]} : vector<8x128xf32> to vector<8x32xf32>
    %248 = vector.extract_strided_slice %246 {offsets = [0, 32], sizes = [8, 32], strides = [1, 1]} : vector<8x128xf32> to vector<8x32xf32>
    %249 = vector.extract_strided_slice %246 {offsets = [0, 64], sizes = [8, 32], strides = [1, 1]} : vector<8x128xf32> to vector<8x32xf32>
    %250 = vector.extract_strided_slice %246 {offsets = [0, 96], sizes = [8, 32], strides = [1, 1]} : vector<8x128xf32> to vector<8x32xf32>
    %251 = arith.mulf %248, %229 : vector<8x32xf32>
    %252 = arith.mulf %247, %249 : vector<8x32xf32>
    %253 = arith.addf %251, %252 : vector<8x32xf32>
    %254 = math.tanh %253 : vector<8x32xf32>
    %255 = arith.mulf %250, %254 : vector<8x32xf32>
    %c0_51 = arith.constant 0 : index
    %c0_52 = arith.constant 0 : index
    %c288 = arith.constant 288 : index
    %256 = vector.load %arg5[%c0_51, %c0_52, %c288] : memref<1x8x384xf32, #tpu.memory_space<vmem>>, vector<1x8x32xf32>
    %257 = vector.shape_cast %256 : vector<1x8x32xf32> to vector<8x32xf32>
    %258 = vector.shape_cast %255 : vector<8x32xf32> to vector<1x8x32xf32>
    tpu.vector_store %arg5[%c0_51, %c0_52, %c288], %258 {strides = array<i32>} : memref<1x8x384xf32, #tpu.memory_space<vmem>>, vector<1x8x32xf32>,
    %259 = vector.extract_strided_slice %9 {offsets = [10, 0, 0], sizes = [1, 8, 128], strides = [1, 1, 1]} : vector<12x8x128xf32> to vector<1x8x128xf32>
    %260 = vector.shape_cast %259 : vector<1x8x128xf32> to vector<8x128xf32>
    %261 = arith.truncf %255 : vector<8x32xf32> to vector<8x32xbf16>
    %cst_53 = arith.constant dense<0.000000e+00> : vector<8x128xf32>
    %262 = tpu.matmul %261, %10, %cst_53 {dimension_numbers = #tpu.dot_dimension_numbers<[1], [0], [0], [1], [0, 0, 1, 1], [], []>} : vector<8x32xbf16>, vector<32x128xbf16>, vector<8x128xf32> -> vector<8x128xf32>
    %263 = arith.addf %260, %262 : vector<8x128xf32>
    %264 = math.tanh %263 : vector<8x128xf32>
    %265 = arith.negf %263 : vector<8x128xf32>
    %266 = math.exp %265 : vector<8x128xf32>
    %cst_54 = arith.constant 1.000000e+00 : f32
    %267 = vector.broadcast %cst_54 : f32 to vector<8x128xf32>
    %268 = arith.addf %267, %266 : vector<8x128xf32>
    %269 = arith.divf %267, %268 : vector<8x128xf32>
    %270 = arith.select %18, %264, %269 : vector<8x128xi1>, vector<8x128xf32>
    %271 = vector.extract_strided_slice %270 {offsets = [0, 0], sizes = [8, 32], strides = [1, 1]} : vector<8x128xf32> to vector<8x32xf32>
    %272 = vector.extract_strided_slice %270 {offsets = [0, 32], sizes = [8, 32], strides = [1, 1]} : vector<8x128xf32> to vector<8x32xf32>
    %273 = vector.extract_strided_slice %270 {offsets = [0, 64], sizes = [8, 32], strides = [1, 1]} : vector<8x128xf32> to vector<8x32xf32>
    %274 = vector.extract_strided_slice %270 {offsets = [0, 96], sizes = [8, 32], strides = [1, 1]} : vector<8x128xf32> to vector<8x32xf32>
    %275 = arith.mulf %272, %253 : vector<8x32xf32>
    %276 = arith.mulf %271, %273 : vector<8x32xf32>
    %277 = arith.addf %275, %276 : vector<8x32xf32>
    %278 = math.tanh %277 : vector<8x32xf32>
    %279 = arith.mulf %274, %278 : vector<8x32xf32>
    %c0_55 = arith.constant 0 : index
    %c0_56 = arith.constant 0 : index
    %c320 = arith.constant 320 : index
    %280 = vector.load %arg5[%c0_55, %c0_56, %c320] : memref<1x8x384xf32, #tpu.memory_space<vmem>>, vector<1x8x32xf32>
    %281 = vector.shape_cast %280 : vector<1x8x32xf32> to vector<8x32xf32>
    %282 = vector.shape_cast %279 : vector<8x32xf32> to vector<1x8x32xf32>
    tpu.vector_store %arg5[%c0_55, %c0_56, %c320], %282 {strides = array<i32>} : memref<1x8x384xf32, #tpu.memory_space<vmem>>, vector<1x8x32xf32>,
    %283 = vector.extract_strided_slice %9 {offsets = [11, 0, 0], sizes = [1, 8, 128], strides = [1, 1, 1]} : vector<12x8x128xf32> to vector<1x8x128xf32>
    %284 = vector.shape_cast %283 : vector<1x8x128xf32> to vector<8x128xf32>
    %285 = arith.truncf %279 : vector<8x32xf32> to vector<8x32xbf16>
    %cst_57 = arith.constant dense<0.000000e+00> : vector<8x128xf32>
    %286 = tpu.matmul %285, %10, %cst_57 {dimension_numbers = #tpu.dot_dimension_numbers<[1], [0], [0], [1], [0, 0, 1, 1], [], []>} : vector<8x32xbf16>, vector<32x128xbf16>, vector<8x128xf32> -> vector<8x128xf32>
    %287 = arith.addf %284, %286 : vector<8x128xf32>
    %288 = math.tanh %287 : vector<8x128xf32>
    %289 = arith.negf %287 : vector<8x128xf32>
    %290 = math.exp %289 : vector<8x128xf32>
    %cst_58 = arith.constant 1.000000e+00 : f32
    %291 = vector.broadcast %cst_58 : f32 to vector<8x128xf32>
    %292 = arith.addf %291, %290 : vector<8x128xf32>
    %293 = arith.divf %291, %292 : vector<8x128xf32>
    %294 = arith.select %18, %288, %293 : vector<8x128xi1>, vector<8x128xf32>
    %295 = vector.extract_strided_slice %294 {offsets = [0, 0], sizes = [8, 32], strides = [1, 1]} : vector<8x128xf32> to vector<8x32xf32>
    %296 = vector.extract_strided_slice %294 {offsets = [0, 32], sizes = [8, 32], strides = [1, 1]} : vector<8x128xf32> to vector<8x32xf32>
    %297 = vector.extract_strided_slice %294 {offsets = [0, 64], sizes = [8, 32], strides = [1, 1]} : vector<8x128xf32> to vector<8x32xf32>
    %298 = vector.extract_strided_slice %294 {offsets = [0, 96], sizes = [8, 32], strides = [1, 1]} : vector<8x128xf32> to vector<8x32xf32>
    %299 = arith.mulf %296, %277 : vector<8x32xf32>
    %300 = arith.mulf %295, %297 : vector<8x32xf32>
    %301 = arith.addf %299, %300 : vector<8x32xf32>
    %302 = math.tanh %301 : vector<8x32xf32>
    %303 = arith.mulf %298, %302 : vector<8x32xf32>
    %c0_59 = arith.constant 0 : index
    %c0_60 = arith.constant 0 : index
    %c352 = arith.constant 352 : index
    %304 = vector.load %arg5[%c0_59, %c0_60, %c352] : memref<1x8x384xf32, #tpu.memory_space<vmem>>, vector<1x8x32xf32>
    %305 = vector.shape_cast %304 : vector<1x8x32xf32> to vector<8x32xf32>
    %306 = vector.shape_cast %303 : vector<8x32xf32> to vector<1x8x32xf32>
    tpu.vector_store %arg5[%c0_59, %c0_60, %c352], %306 {strides = array<i32>} : memref<1x8x384xf32, #tpu.memory_space<vmem>>, vector<1x8x32xf32>,
    %c0_61 = arith.constant 0 : index
    %c0_62 = arith.constant 0 : index
    %307 = vector.load %arg8[%c0_61, %c0_62] : memref<8x32xf32, #tpu.memory_space<vmem>>, vector<8x32xf32>
    tpu.vector_store %arg8[%c0_61, %c0_62], %303 {strides = array<i32>} : memref<8x32xf32, #tpu.memory_space<vmem>>, vector<8x32xf32>,
    %c0_63 = arith.constant 0 : index
    %c0_64 = arith.constant 0 : index
    %308 = vector.load %arg9[%c0_63, %c0_64] : memref<8x32xf32, #tpu.memory_space<vmem>>, vector<8x32xf32>
    tpu.vector_store %arg9[%c0_63, %c0_64], %301 {strides = array<i32>} : memref<8x32xf32, #tpu.memory_space<vmem>>, vector<8x32xf32>,
    %c0_i32_65 = arith.constant 0 : i32
    %309 = arith.cmpi eq, %arg0, %c0_i32_65 : i32
    %310 = arith.extui %309 : i1 to i32
    %c0_i32_66 = arith.constant 0 : i32
    %311 = arith.cmpi ne, %310, %c0_i32_66 : i32
    scf.if %311 {
      %c0_67 = arith.constant 0 : index
      %c0_68 = arith.constant 0 : index
      %312 = vector.load %arg6[%c0_67, %c0_68] : memref<8x32xf32, #tpu.memory_space<vmem>>, vector<8x32xf32>
      tpu.vector_store %arg6[%c0_67, %c0_68], %303 {strides = array<i32>} : memref<8x32xf32, #tpu.memory_space<vmem>>, vector<8x32xf32>,
      %c0_69 = arith.constant 0 : index
      %c0_70 = arith.constant 0 : index
      %313 = vector.load %arg7[%c0_69, %c0_70] : memref<8x32xf32, #tpu.memory_space<vmem>>, vector<8x32xf32>
      tpu.vector_store %arg7[%c0_69, %c0_70], %301 {strides = array<i32>} : memref<8x32xf32, #tpu.memory_space<vmem>>, vector<8x32xf32>,
    } else {
    }
    return
  }
  func.func @transform_0(%arg0: i32) -> (i32, i32) {
    %c0_i32 = arith.constant 0 : i32
    %c0_i32_0 = arith.constant 0 : i32
    return %arg0, %c0_i32 : i32, i32
  }
  func.func @transform_1(%arg0: i32) -> (i32, i32) {
    %c0_i32 = arith.constant 0 : i32
    %c0_i32_0 = arith.constant 0 : i32
    %c0_i32_1 = arith.constant 0 : i32
    return %c0_i32, %c0_i32_0 : i32, i32
  }
  func.func @transform_2(%arg0: i32) -> (i32, i32) {
    %c0_i32 = arith.constant 0 : i32
    %c0_i32_0 = arith.constant 0 : i32
    %c0_i32_1 = arith.constant 0 : i32
    return %c0_i32, %c0_i32_0 : i32, i32
  }
  func.func @transform_3(%arg0: i32) -> (i32, i32) {
    %c0_i32 = arith.constant 0 : i32
    %c0_i32_0 = arith.constant 0 : i32
    %c0_i32_1 = arith.constant 0 : i32
    return %c0_i32, %c0_i32_0 : i32, i32
  }
  func.func @transform_4(%arg0: i32) -> (i32, i32, i32) {
    %c0_i32 = arith.constant 0 : i32
    %c0_i32_0 = arith.constant 0 : i32
    %c0_i32_1 = arith.constant 0 : i32
    return %arg0, %c0_i32, %c0_i32_0 : i32, i32, i32
  }
  func.func @transform_5(%arg0: i32) -> (i32, i32) {
    %c0_i32 = arith.constant 0 : i32
    %c0_i32_0 = arith.constant 0 : i32
    %c0_i32_1 = arith.constant 0 : i32
    return %c0_i32, %c0_i32_0 : i32, i32
  }
  func.func @transform_6(%arg0: i32) -> (i32, i32) {
    %c0_i32 = arith.constant 0 : i32
    %c0_i32_0 = arith.constant 0 : i32
    %c0_i32_1 = arith.constant 0 : i32
    return %c0_i32, %c0_i32_0 : i32, i32
  }
}

</mosaic_0001>

<llo_original>
// kernel: tpu_custom_call.1
$region0: #{tpu_custom_call.1}
  #allocation0 [shape = 'u32[]', space=smem, size = 0x4, offset = 0x4, fixed_abs, tag = 'smem constant byte address 0x4 - core index']
  #allocation1 [shape = 'u32[144,128]{1,0:T(1,128)}', space=vmem, size = 0x12000, scoped, tag = 'internal scratch']
  #allocation2 [shape = 'f32[8,32]{1,0:T(8,128)}', space=vmem, size = 0x1000, scoped, tag = 'scratch operand']
  #allocation3 [shape = 'f32[8,32]{1,0:T(8,128)}', space=vmem, size = 0x1000, scoped, tag = 'scratch operand']
  %s0 = inlined_call_operand.vmem [shape: bf16[96,16], index: 0, kind: input, shape index: {}]
  %s1 = inlined_call_operand.vmem [shape: bf16[16,128], index: 1, kind: input, shape index: {}]
  %s2 = inlined_call_operand.vmem [shape: f32[1,128], index: 2, kind: input, shape index: {}]
  %s3 = inlined_call_operand.vmem [shape: bf16[32,128], index: 3, kind: input, shape index: {}]
  %s4 = inlined_call_operand.hbm [shape: f32[1,8,384], index: 4, kind: output, shape index: {0}]
  %s5 = inlined_call_operand.hbm [shape: f32[8,32], index: 5, kind: output, shape index: {1}]
  %s6 = inlined_call_operand.hbm [shape: f32[8,32], index: 6, kind: output, shape index: {2}]
  %7 = xla_tuple %s4, %s5, %s6
  %s8 = sld [smem:[#allocation0]]
  $region50: #{tpu_custom_call.1} parent=0
    _
  %s10 = ssub.s32 1, %s8
  %s11 = scalar_select 0, %s10, %s8
  $region1: #{tpu_custom_call.1} parent=0
    #allocation4 [shape = 'u8[12288]{0}', space=vmem, size = 0x3000, scoped, tag = 'output window, operand 0, single buffered']
    #allocation5 [shape = 's32[1]{0}', space=sflag, size = 0x4, scoped, tag = 'scoped memory for tpu_custom_call.1']
    #allocation6 [shape = 'u8[4096]{0}', space=vmem, size = 0x1000, scoped, tag = 'output window, operand 1, single buffered']
    #allocation7 [shape = 's32[1]{0}', space=sflag, size = 0x4, scoped, tag = 'scoped memory for tpu_custom_call.1']
    #allocation8 [shape = 'u8[4096]{0}', space=vmem, size = 0x1000, scoped, tag = 'output window, operand 2, single buffered']
    %12 = vsyncpa [#allocation5], 0
    %13 = vsyncpa [#allocation7], 0
    // Predicated region
    $region2: #{tpu_custom_call.1} parent=1 // pred_check
      _
    $region3: #{tpu_custom_call.1} parent=1 // pred_check_branch
      %15 = sbr.rel (0) target = $region5
    $region4: #{tpu_custom_call.1} parent=1 // pred_region
      _
    $region5: #{tpu_custom_call.1} parent=1 // pred_fallthru
      _
    // Predicated region
    $region6: #{tpu_custom_call.1} parent=1 // pred_check
      _
    $region7: #{tpu_custom_call.1} parent=1 // pred_check_branch
      %17 = sbr.rel (0) target = $region9
    $region8: #{tpu_custom_call.1} parent=1 // pred_region
      _
    $region9: #{tpu_custom_call.1} parent=1 // pred_fallthru
      _
    // Predicated region
    $region10: #{tpu_custom_call.1} parent=1 // pred_check
      _
    $region11: #{tpu_custom_call.1} parent=1 // pred_check_branch
      %19 = sbr.rel (0) target = $region13
    $region12: #{tpu_custom_call.1} parent=1 // pred_region
      _
    $region13: #{tpu_custom_call.1} parent=1 // pred_fallthru
      _
    // Predicated region
    $region14: #{tpu_custom_call.1} parent=1 // pred_check
      _
    $region15: #{tpu_custom_call.1} parent=1 // pred_check_branch
      %21 = sbr.rel (0) target = $region17
    $region16: #{tpu_custom_call.1} parent=1 // pred_region
      _
    $region17: #{tpu_custom_call.1} parent=1 // pred_fallthru
      _
    %p23 = scmp.eq.s32.totalorder 0, 0
    // Predicated region
    $region18: #{tpu_custom_call.1} parent=1 // pred_check
      %p24 = pneg %p23
    $region19: #{tpu_custom_call.1} parent=1 // pred_check_branch
      %26 = sbr.rel (%p24) target = $region21
    $region20: #{tpu_custom_call.1} parent=1 // pred_region
      %vm27 = vcmask 261120
      %28 = vst.msk [vmem:[#allocation2] sm:$0xff] %vm27, 0.0
      %29 = vst.msk [vmem:[#allocation3] sm:$0xff] %vm27, 0.0
    $region21: #{tpu_custom_call.1} parent=1 // pred_fallthru
      _
    %v30 = vld [vmem:[%s0] sm:$0xf]
    %v31 = vld [vmem:[%s0 + $0x4] sm:$0xf]
    %v32 = vld [vmem:[%s0 + $0x8] sm:$0xf]
    %v33 = vld [vmem:[%s0 + $0xc] sm:$0xf]
    %v34 = vld [vmem:[%s0 + $0x10] sm:$0xf]
    %v35 = vld [vmem:[%s0 + $0x14] sm:$0xf]
    %v36 = vld [vmem:[%s0 + $0x18] sm:$0xf]
    %v37 = vld [vmem:[%s0 + $0x1c] sm:$0xf]
    %v38 = vld [vmem:[%s0 + $0x20] sm:$0xf]
    %v39 = vld [vmem:[%s0 + $0x24] sm:$0xf]
    %v40 = vld [vmem:[%s0 + $0x28] sm:$0xf]
    %v41 = vld [vmem:[%s0 + $0x2c] sm:$0xf]
    %v42 = vld [vmem:[%s1] sm:$0xf]
    %v43 = vld [vmem:[%s1 + $0x4] sm:$0xf]
    %v44 = vld [vmem:[%s2] sm:$0x1]
    %v46 = vlaneseq
    %v47 = vshrl.u32 %v46, 7
    %v48 = vsub.s32 0, %v47
    %v49 = vrot.slane %v44, %v48
    %v63 = vunpack.c.l.b16 %v30
    %v64 = vunpack.c.l.b16 %v31
    %v65 = vunpack.c.l.b16 %v32
    %v66 = vunpack.c.l.b16 %v33
    %v67 = vunpack.c.l.b16 %v34
    %v68 = vunpack.c.l.b16 %v35
    %v69 = vunpack.c.l.b16 %v36
    %v70 = vunpack.c.l.b16 %v37
    %v71 = vunpack.c.l.b16 %v38
    %v72 = vunpack.c.l.b16 %v39
    %v73 = vunpack.c.l.b16 %v40
    %v74 = vunpack.c.l.b16 %v41
    %v75 = vpack.c.b16 %v64, %v63
    %v76 = vpack.c.b16 %v66, %v65
    %v77 = vpack.c.b16 %v68, %v67
    %v78 = vpack.c.b16 %v70, %v69
    %v79 = vpack.c.b16 %v72, %v71
    %v80 = vpack.c.b16 %v74, %v73
    %v83 = vunpack.c.l.b16 %v42
    %v84 = vunpack.c.l.b16 %v43
    %v85 = vpack.c.b16 %v84, %v83
    %vm87 = vcmask 130048
    %v89 = vsel %vm87, %v75, 0
    %v92 = vsel %vm87, %v76, 0
    %v95 = vsel %vm87, %v77, 0
    %v98 = vsel %vm87, %v78, 0
    %v101 = vsel %vm87, %v79, 0
    %v104 = vsel %vm87, %v80, 0
    %106 = vmatprep.subr.bf16.mxu0 0
    %107 = vmatpush1.bf16.msra.mxu0 %v85
    %108 = vmatprep.subr.bf16.mxu0 0
    %109 = vmatpush1.bf16.msra.mxu0 0
    %110 = vmatprep.subr.bf16.mxu0 0
    %111 = vmatpush1.bf16.msra.mxu0 0
    %112 = vmatprep.subr.bf16.mxu0 0
    %113 = vmatpush1.bf16.msra.mxu0 0
    %114 = vmatprep.subr.bf16.mxu0 0
    %115 = vmatpush1.bf16.msra.mxu0 0
    %116 = vmatprep.subr.bf16.mxu0 0
    %117 = vmatpush1.bf16.msra.mxu0 0
    %118 = vmatprep.subr.bf16.mxu0 0
    %119 = vmatpush1.bf16.msra.mxu0 0
    %120 = vmatprep.subr.bf16.mxu0 0
    %121 = vmatpush1.bf16.msra.mxu0 0
    %122 = vmatprep.subr.bf16.mxu0 0
    %123 = vmatpush1.bf16.msra.mxu0 0
    %124 = vmatprep.subr.bf16.mxu0 0
    %125 = vmatpush1.bf16.msra.mxu0 0
    %126 = vmatprep.subr.bf16.mxu0 0
    %127 = vmatpush1.bf16.msra.mxu0 0
    %128 = vmatprep.subr.bf16.mxu0 0
    %129 = vmatpush1.bf16.msra.mxu0 0
    %130 = vmatprep.subr.bf16.mxu0 0
    %131 = vmatpush1.bf16.msra.mxu0 0
    %132 = vmatprep.subr.bf16.mxu0 0
    %133 = vmatpush1.bf16.msra.mxu0 0
    %134 = vmatprep.subr.bf16.mxu0 0
    %135 = vmatpush1.bf16.msra.mxu0 0
    %136 = vmatprep.subr.bf16.mxu0 0
    %137 = vmatpush1.bf16.msra.mxu0 0
    %138 = vmatprep.mubr.bf16.mxu0 0
    %139 = vmatmul.mubr.bf16.gmra.mrb[0].mxu0 %v89
    %v140 = vpop.f32.mrb[0].mxu0
    %v141 = vadd.f32 %v49, %v140
    %v142 = vpop.f32.mrb[0].mxu0
    %v143 = vpop.f32.mrb[0].mxu0
    %v144 = vadd.f32 %v49, %v143
    %v145 = vpop.f32.mrb[0].mxu0
    %146 = vmatprep.mubr.bf16.mxu0 0
    %147 = vmatmul.mubr.bf16.gmra.mrb[0].mxu0 %v92
    %v148 = vpop.f32.mrb[0].mxu0
    %v149 = vadd.f32 %v49, %v148
    %v150 = vpop.f32.mrb[0].mxu0
    %v151 = vpop.f32.mrb[0].mxu0
    %v152 = vadd.f32 %v49, %v151
    %v153 = vpop.f32.mrb[0].mxu0
    %154 = vmatprep.mubr.bf16.mxu0 0
    %155 = vmatmul.mubr.bf16.gmra.mrb[0].mxu0 %v95
    %v156 = vpop.f32.mrb[0].mxu0
    %v157 = vadd.f32 %v49, %v156
    %v158 = vpop.f32.mrb[0].mxu0
    %v159 = vpop.f32.mrb[0].mxu0
    %v160 = vadd.f32 %v49, %v159
    %v161 = vpop.f32.mrb[0].mxu0
    %162 = vmatprep.mubr.bf16.mxu0 0
    %163 = vmatmul.mubr.bf16.gmra.mrb[0].mxu0 %v98
    %v164 = vpop.f32.mrb[0].mxu0
    %v165 = vadd.f32 %v49, %v164
    %v166 = vpop.f32.mrb[0].mxu0
    %v167 = vpop.f32.mrb[0].mxu0
    %v168 = vadd.f32 %v49, %v167
    %v169 = vpop.f32.mrb[0].mxu0
    %170 = vmatprep.mubr.bf16.mxu0 0
    %171 = vmatmul.mubr.bf16.gmra.mrb[0].mxu0 %v101
    %v172 = vpop.f32.mrb[0].mxu0
    %v173 = vadd.f32 %v49, %v172
    %v174 = vpop.f32.mrb[0].mxu0
    %v175 = vpop.f32.mrb[0].mxu0
    %v176 = vadd.f32 %v49, %v175
    %v177 = vpop.f32.mrb[0].mxu0
    %178 = vmatprep.mubr.bf16.mxu0 0
    %179 = vmatmul.mubr.bf16.gmra.mrb[0].mxu0 %v104
    %v180 = vpop.f32.mrb[0].mxu0
    %v181 = vadd.f32 %v49, %v180
    %v182 = vpop.f32.mrb[0].mxu0
    %v183 = vpop.f32.mrb[0].mxu0
    %v184 = vadd.f32 %v49, %v183
    %v185 = vpop.f32.mrb[0].mxu0
    %186 = vdwg.mxu0
    %v187 = vld [vmem:[%s3] sm:$0xf]
    %v188 = vld [vmem:[%s3 + $0x4] sm:$0xf]
    %v189 = vld [vmem:[%s3 + $0x8] sm:$0xf]
    %v190 = vld [vmem:[%s3 + $0xc] sm:$0xf]
    %v191 = vld [vmem:[#allocation2] sm:$0xff]
    %v192 = vld [vmem:[#allocation3] sm:$0xff]
    %v193 = vlaneseq
    %v194 = vand.u32 %v193, 127
    %vm195 = vcmp.ge.s32.totalorder %v194, 64
    %vm196 = vcmp.lt.s32.totalorder %v194, 96
    %vm197 = vmand %vm195, %vm196
    %v198 = vpack.c.bf16 %v191, %v191
    %v203 = vunpack.c.l.b16 %v187
    %v204 = vunpack.c.l.b16 %v188
    %v205 = vunpack.c.l.b16 %v189
    %v206 = vunpack.c.l.b16 %v190
    %v207 = vpack.c.b16 %v204, %v203
    %v208 = vpack.c.b16 %v206, %v205
    %vm211 = vcmask 261120
    %v213 = vsel %vm211, %v198, 0
    %215 = vmatprep.subr.bf16.mxu0 0
    %216 = vmatpush1.bf16.msra.mxu0 %v207
    %217 = vmatprep.subr.bf16.mxu0 0
    %218 = vmatpush1.bf16.msra.mxu0 %v208
    %219 = vmatprep.subr.bf16.mxu0 0
    %220 = vmatpush1.bf16.msra.mxu0 0
    %221 = vmatprep.subr.bf16.mxu0 0
    %222 = vmatpush1.bf16.msra.mxu0 0
    %223 = vmatprep.subr.bf16.mxu0 0
    %224 = vmatpush1.bf16.msra.mxu0 0
    %225 = vmatprep.subr.bf16.mxu0 0
    %226 = vmatpush1.bf16.msra.mxu0 0
    %227 = vmatprep.subr.bf16.mxu0 0
    %228 = vmatpush1.bf16.msra.mxu0 0
    %229 = vmatprep.subr.bf16.mxu0 0
    %230 = vmatpush1.bf16.msra.mxu0 0
    %231 = vmatprep.subr.bf16.mxu0 0
    %232 = vmatpush1.bf16.msra.mxu0 0
    %233 = vmatprep.subr.bf16.mxu0 0
    %234 = vmatpush1.bf16.msra.mxu0 0
    %235 = vmatprep.subr.bf16.mxu0 0
    %236 = vmatpush1.bf16.msra.mxu0 0
    %237 = vmatprep.subr.bf16.mxu0 0
    %238 = vmatpush1.bf16.msra.mxu0 0
    %239 = vmatprep.subr.bf16.mxu0 0
    %240 = vmatpush1.bf16.msra.mxu0 0
    %241 = vmatprep.subr.bf16.mxu0 0
    %242 = vmatpush1.bf16.msra.mxu0 0
    %243 = vmatprep.subr.bf16.mxu0 0
    %244 = vmatpush1.bf16.msra.mxu0 0
    %245 = vmatprep.subr.bf16.mxu0 0
    %246 = vmatpush1.bf16.msra.mxu0 0
    %247 = vmatprep.mubr.bf16.mxu0 0
    %248 = vmatmul.mubr.bf16.gmra.mrb[0].mxu0 %v213
    %v249 = vpop.f32.mrb[0].mxu0
    %v250 = vadd.f32 0.0, %v249
    %v251 = vpop.f32.mrb[0].mxu0
    %v252 = vpop.f32.mrb[0].mxu0
    %v253 = vpop.f32.mrb[0].mxu0
    %254 = vdwg.mxu0
    %v255 = vadd.f32 %v141, %v250
    %v256 = vtanh.pop %v255
    %v257 = vxor.u32 %v255, 2147483648
    %v258 = vmul.f32 %v257, 1.442695
    %v259 = vpow.pop %v258
    %v260 = vadd.f32 %v259, 1.0
    %v261 = vrcp.pop %v260
    %v262 = vmul.f32 1.0, %v261
    %v263 = vsel %vm197, %v256, %v262
    %265 = vrot.lane.b32.xlu0 %v192, 32
    %v266 = vpop.permute.xlu0 %265
    %v268 = vmul.f32 %v263, %v266
    %270 = vrot.lane.b32.xlu0 %v263, 64
    %v271 = vpop.permute.xlu0 %270
    %v273 = vmul.f32 %v263, %v271
    %275 = vrot.lane.b32.xlu0 %v273, 32
    %v276 = vpop.permute.xlu0 %275
    %v278 = vadd.f32 %v268, %v276
    %v279 = vtanh.pop %v278
    %281 = vrot.lane.b32.xlu0 %v279, 64
    %v282 = vpop.permute.xlu0 %281
    %v284 = vmul.f32 %v263, %v282
    %286 = vrot.lane.b32.xlu0 %v284, 32
    %v287 = vpop.permute.xlu0 %286
    %289 = vst.msk [vmem:[#allocation4] sm:$0xff] %vm211, %v287
    %v290 = vpack.c.bf16 %v284, %v284
    %292 = vrot.lane.b32.xlu0 %v290, 32
    %v293 = vpop.permute.xlu0 %292
    %v295 = vsel %vm211, %v293, 0
    %297 = vmatprep.subr.bf16.mxu0 0
    %298 = vmatpush1.bf16.msra.mxu0 %v207
    %299 = vmatprep.subr.bf16.mxu0 0
    %300 = vmatpush1.bf16.msra.mxu0 %v208
    %301 = vmatprep.subr.bf16.mxu0 0
    %302 = vmatpush1.bf16.msra.mxu0 0
    %303 = vmatprep.subr.bf16.mxu0 0
    %304 = vmatpush1.bf16.msra.mxu0 0
    %305 = vmatprep.subr.bf16.mxu0 0
    %306 = vmatpush1.bf16.msra.mxu0 0
    %307 = vmatprep.subr.bf16.mxu0 0
    %308 = vmatpush1.bf16.msra.mxu0 0
    %309 = vmatprep.subr.bf16.mxu0 0
    %310 = vmatpush1.bf16.msra.mxu0 0
    %311 = vmatprep.subr.bf16.mxu0 0
    %312 = vmatpush1.bf16.msra.mxu0 0
    %313 = vmatprep.subr.bf16.mxu0 0
    %314 = vmatpush1.bf16.msra.mxu0 0
    %315 = vmatprep.subr.bf16.mxu0 0
    %316 = vmatpush1.bf16.msra.mxu0 0
    %317 = vmatprep.subr.bf16.mxu0 0
    %318 = vmatpush1.bf16.msra.mxu0 0
    %319 = vmatprep.subr.bf16.mxu0 0
    %320 = vmatpush1.bf16.msra.mxu0 0
    %321 = vmatprep.subr.bf16.mxu0 0
    %322 = vmatpush1.bf16.msra.mxu0 0
    %323 = vmatprep.subr.bf16.mxu0 0
    %324 = vmatpush1.bf16.msra.mxu0 0
    %325 = vmatprep.subr.bf16.mxu0 0
    %326 = vmatpush1.bf16.msra.mxu0 0
    %327 = vmatprep.subr.bf16.mxu0 0
    %328 = vmatpush1.bf16.msra.mxu0 0
    %329 = vmatprep.mubr.bf16.mxu0 0
    %330 = vmatmul.mubr.bf16.gmra.mrb[0].mxu0 %v295
    %v331 = vpop.f32.mrb[0].mxu0
    %v332 = vadd.f32 0.0, %v331
    %v333 = vpop.f32.mrb[0].mxu0
    %v334 = vpop.f32.mrb[0].mxu0
    %v335 = vpop.f32.mrb[0].mxu0
    %336 = vdwg.mxu0
    %v337 = vadd.f32 %v144, %v332
    %v338 = vtanh.pop %v337
    %v339 = vxor.u32 %v337, 2147483648
    %v340 = vmul.f32 %v339, 1.442695
    %v341 = vpow.pop %v340
    %v342 = vadd.f32 %v341, 1.0
    %v343 = vrcp.pop %v342
    %v344 = vmul.f32 1.0, %v343
    %v345 = vsel %vm197, %v338, %v344
    %v346 = vmul.f32 %v345, %v278
    %348 = vrot.lane.b32.xlu0 %v345, 64
    %v349 = vpop.permute.xlu0 %348
    %v351 = vmul.f32 %v345, %v349
    %353 = vrot.lane.b32.xlu0 %v351, 32
    %v354 = vpop.permute.xlu0 %353
    %v356 = vadd.f32 %v346, %v354
    %v357 = vtanh.pop %v356
    %359 = vrot.lane.b32.xlu0 %v357, 64
    %v360 = vpop.permute.xlu0 %359
    %v362 = vmul.f32 %v345, %v360
    %364 = vrot.lane.b32.xlu0 %v362, 64
    %v365 = vpop.permute.xlu0 %364
    %vm367 = vcmask 523520
    %368 = vst.msk [vmem:[#allocation4] sm:$0xff] %vm367, %v365
    %v369 = vpack.c.bf16 %v362, %v362
    %371 = vrot.lane.b32.xlu0 %v369, 32
    %v372 = vpop.permute.xlu0 %371
    %v374 = vsel %vm211, %v372, 0
    %376 = vmatprep.subr.bf16.mxu0 0
    %377 = vmatpush1.bf16.msra.mxu0 %v207
    %378 = vmatprep.subr.bf16.mxu0 0
    %379 = vmatpush1.bf16.msra.mxu0 %v208
    %380 = vmatprep.subr.bf16.mxu0 0
    %381 = vmatpush1.bf16.msra.mxu0 0
    %382 = vmatprep.subr.bf16.mxu0 0
    %383 = vmatpush1.bf16.msra.mxu0 0
    %384 = vmatprep.subr.bf16.mxu0 0
    %385 = vmatpush1.bf16.msra.mxu0 0
    %386 = vmatprep.subr.bf16.mxu0 0
    %387 = vmatpush1.bf16.msra.mxu0 0
    %388 = vmatprep.subr.bf16.mxu0 0
    %389 = vmatpush1.bf16.msra.mxu0 0
    %390 = vmatprep.subr.bf16.mxu0 0
    %391 = vmatpush1.bf16.msra.mxu0 0
    %392 = vmatprep.subr.bf16.mxu0 0
    %393 = vmatpush1.bf16.msra.mxu0 0
    %394 = vmatprep.subr.bf16.mxu0 0
    %395 = vmatpush1.bf16.msra.mxu0 0
    %396 = vmatprep.subr.bf16.mxu0 0
    %397 = vmatpush1.bf16.msra.mxu0 0
    %398 = vmatprep.subr.bf16.mxu0 0
    %399 = vmatpush1.bf16.msra.mxu0 0
    %400 = vmatprep.subr.bf16.mxu0 0
    %401 = vmatpush1.bf16.msra.mxu0 0
    %402 = vmatprep.subr.bf16.mxu0 0
    %403 = vmatpush1.bf16.msra.mxu0 0
    %404 = vmatprep.subr.bf16.mxu0 0
    %405 = vmatpush1.bf16.msra.mxu0 0
    %406 = vmatprep.subr.bf16.mxu0 0
    %407 = vmatpush1.bf16.msra.mxu0 0
    %408 = vmatprep.mubr.bf16.mxu0 0
    %409 = vmatmul.mubr.bf16.gmra.mrb[0].mxu0 %v374
    %v410 = vpop.f32.mrb[0].mxu0
    %v411 = vadd.f32 0.0, %v410
    %v412 = vpop.f32.mrb[0].mxu0
    %v413 = vpop.f32.mrb[0].mxu0
    %v414 = vpop.f32.mrb[0].mxu0
    %415 = vdwg.mxu0
    %v416 = vadd.f32 %v149, %v411
    %v417 = vtanh.pop %v416
    %v418 = vxor.u32 %v416, 2147483648
    %v419 = vmul.f32 %v418, 1.442695
    %v420 = vpow.pop %v419
    %v421 = vadd.f32 %v420, 1.0
    %v422 = vrcp.pop %v421
    %v423 = vmul.f32 1.0, %v422
    %v424 = vsel %vm197, %v417, %v423
    %v425 = vmul.f32 %v424, %v356
    %427 = vrot.lane.b32.xlu0 %v424, 64
    %v428 = vpop.permute.xlu0 %427
    %v430 = vmul.f32 %v424, %v428
    %432 = vrot.lane.b32.xlu0 %v430, 32
    %v433 = vpop.permute.xlu0 %432
    %v435 = vadd.f32 %v425, %v433
    %v436 = vtanh.pop %v435
    %438 = vrot.lane.b32.xlu0 %v436, 64
    %v439 = vpop.permute.xlu0 %438
    %v441 = vmul.f32 %v424, %v439
    %443 = vrot.lane.b32.xlu0 %v441, 96
    %v444 = vpop.permute.xlu0 %443
    %vm446 = vcmask 785920
    %447 = vst.msk [vmem:[#allocation4] sm:$0xff] %vm446, %v444
    %v448 = vpack.c.bf16 %v441, %v441
    %450 = vrot.lane.b32.xlu0 %v448, 32
    %v451 = vpop.permute.xlu0 %450
    %v453 = vsel %vm211, %v451, 0
    %455 = vmatprep.subr.bf16.mxu0 0
    %456 = vmatpush1.bf16.msra.mxu0 %v207
    %457 = vmatprep.subr.bf16.mxu0 0
    %458 = vmatpush1.bf16.msra.mxu0 %v208
    %459 = vmatprep.subr.bf16.mxu0 0
    %460 = vmatpush1.bf16.msra.mxu0 0
    %461 = vmatprep.subr.bf16.mxu0 0
    %462 = vmatpush1.bf16.msra.mxu0 0
    %463 = vmatprep.subr.bf16.mxu0 0
    %464 = vmatpush1.bf16.msra.mxu0 0
    %465 = vmatprep.subr.bf16.mxu0 0
    %466 = vmatpush1.bf16.msra.mxu0 0
    %467 = vmatprep.subr.bf16.mxu0 0
    %468 = vmatpush1.bf16.msra.mxu0 0
    %469 = vmatprep.subr.bf16.mxu0 0
    %470 = vmatpush1.bf16.msra.mxu0 0
    %471 = vmatprep.subr.bf16.mxu0 0
    %472 = vmatpush1.bf16.msra.mxu0 0
    %473 = vmatprep.subr.bf16.mxu0 0
    %474 = vmatpush1.bf16.msra.mxu0 0
    %475 = vmatprep.subr.bf16.mxu0 0
    %476 = vmatpush1.bf16.msra.mxu0 0
    %477 = vmatprep.subr.bf16.mxu0 0
    %478 = vmatpush1.bf16.msra.mxu0 0
    %479 = vmatprep.subr.bf16.mxu0 0
    %480 = vmatpush1.bf16.msra.mxu0 0
    %481 = vmatprep.subr.bf16.mxu0 0
    %482 = vmatpush1.bf16.msra.mxu0 0
    %483 = vmatprep.subr.bf16.mxu0 0
    %484 = vmatpush1.bf16.msra.mxu0 0
    %485 = vmatprep.subr.bf16.mxu0 0
    %486 = vmatpush1.bf16.msra.mxu0 0
    %487 = vmatprep.mubr.bf16.mxu0 0
    %488 = vmatmul.mubr.bf16.gmra.mrb[0].mxu0 %v453
    %v489 = vpop.f32.mrb[0].mxu0
    %v490 = vadd.f32 0.0, %v489
    %v491 = vpop.f32.mrb[0].mxu0
    %v492 = vpop.f32.mrb[0].mxu0
    %v493 = vpop.f32.mrb[0].mxu0
    %494 = vdwg.mxu0
    %v495 = vadd.f32 %v152, %v490
    %v496 = vtanh.pop %v495
    %v497 = vxor.u32 %v495, 2147483648
    %v498 = vmul.f32 %v497, 1.442695
    %v499 = vpow.pop %v498
    %v500 = vadd.f32 %v499, 1.0
    %v501 = vrcp.pop %v500
    %v502 = vmul.f32 1.0, %v501
    %v503 = vsel %vm197, %v496, %v502
    %v504 = vmul.f32 %v503, %v435
    %506 = vrot.lane.b32.xlu0 %v503, 64
    %v507 = vpop.permute.xlu0 %506
    %v509 = vmul.f32 %v503, %v507
    %511 = vrot.lane.b32.xlu0 %v509, 32
    %v512 = vpop.permute.xlu0 %511
    %v514 = vadd.f32 %v504, %v512
    %v515 = vtanh.pop %v514
    %517 = vrot.lane.b32.xlu0 %v515, 64
    %v518 = vpop.permute.xlu0 %517
    %v520 = vmul.f32 %v503, %v518
    %vm521 = vcmask 1048320
    %522 = vst.msk [vmem:[#allocation4] sm:$0xff] %vm521, %v520
    %v523 = vpack.c.bf16 %v520, %v520
    %525 = vrot.lane.b32.xlu0 %v523, 32
    %v526 = vpop.permute.xlu0 %525
    %v528 = vsel %vm211, %v526, 0
    %530 = vmatprep.subr.bf16.mxu0 0
    %531 = vmatpush1.bf16.msra.mxu0 %v207
    %532 = vmatprep.subr.bf16.mxu0 0
    %533 = vmatpush1.bf16.msra.mxu0 %v208
    %534 = vmatprep.subr.bf16.mxu0 0
    %535 = vmatpush1.bf16.msra.mxu0 0
    %536 = vmatprep.subr.bf16.mxu0 0
    %537 = vmatpush1.bf16.msra.mxu0 0
    %538 = vmatprep.subr.bf16.mxu0 0
    %539 = vmatpush1.bf16.msra.mxu0 0
    %540 = vmatprep.subr.bf16.mxu0 0
    %541 = vmatpush1.bf16.msra.mxu0 0
    %542 = vmatprep.subr.bf16.mxu0 0
    %543 = vmatpush1.bf16.msra.mxu0 0
    %544 = vmatprep.subr.bf16.mxu0 0
    %545 = vmatpush1.bf16.msra.mxu0 0
    %546 = vmatprep.subr.bf16.mxu0 0
    %547 = vmatpush1.bf16.msra.mxu0 0
    %548 = vmatprep.subr.bf16.mxu0 0
    %549 = vmatpush1.bf16.msra.mxu0 0
    %550 = vmatprep.subr.bf16.mxu0 0
    %551 = vmatpush1.bf16.msra.mxu0 0
    %552 = vmatprep.subr.bf16.mxu0 0
    %553 = vmatpush1.bf16.msra.mxu0 0
    %554 = vmatprep.subr.bf16.mxu0 0
    %555 = vmatpush1.bf16.msra.mxu0 0
    %556 = vmatprep.subr.bf16.mxu0 0
    %557 = vmatpush1.bf16.msra.mxu0 0
    %558 = vmatprep.subr.bf16.mxu0 0
    %559 = vmatpush1.bf16.msra.mxu0 0
    %560 = vmatprep.subr.bf16.mxu0 0
    %561 = vmatpush1.bf16.msra.mxu0 0
    %562 = vmatprep.mubr.bf16.mxu0 0
    %563 = vmatmul.mubr.bf16.gmra.mrb[0].mxu0 %v528
    %v564 = vpop.f32.mrb[0].mxu0
    %v565 = vadd.f32 0.0, %v564
    %v566 = vpop.f32.mrb[0].mxu0
    %v567 = vpop.f32.mrb[0].mxu0
    %v568 = vpop.f32.mrb[0].mxu0
    %569 = vdwg.mxu0
    %v570 = vadd.f32 %v157, %v565
    %v571 = vtanh.pop %v570
    %v572 = vxor.u32 %v570, 2147483648
    %v573 = vmul.f32 %v572, 1.442695
    %v574 = vpow.pop %v573
    %v575 = vadd.f32 %v574, 1.0
    %v576 = vrcp.pop %v575
    %v577 = vmul.f32 1.0, %v576
    %v578 = vsel %vm197, %v571, %v577
    %v579 = vmul.f32 %v578, %v514
    %581 = vrot.lane.b32.xlu0 %v578, 64
    %v582 = vpop.permute.xlu0 %581
    %v584 = vmul.f32 %v578, %v582
    %586 = vrot.lane.b32.xlu0 %v584, 32
    %v587 = vpop.permute.xlu0 %586
    %v589 = vadd.f32 %v579, %v587
    %v590 = vtanh.pop %v589
    %592 = vrot.lane.b32.xlu0 %v590, 64
    %v593 = vpop.permute.xlu0 %592
    %v595 = vmul.f32 %v578, %v593
    %597 = vrot.lane.b32.xlu0 %v595, 32
    %v598 = vpop.permute.xlu0 %597
    %600 = vst.msk [vmem:[#allocation4 + $0x8] sm:$0xff] %vm211, %v598
    %v601 = vpack.c.bf16 %v595, %v595
    %603 = vrot.lane.b32.xlu0 %v601, 32
    %v604 = vpop.permute.xlu0 %603
    %v606 = vsel %vm211, %v604, 0
    %608 = vmatprep.subr.bf16.mxu0 0
    %609 = vmatpush1.bf16.msra.mxu0 %v207
    %610 = vmatprep.subr.bf16.mxu0 0
    %611 = vmatpush1.bf16.msra.mxu0 %v208
    %612 = vmatprep.subr.bf16.mxu0 0
    %613 = vmatpush1.bf16.msra.mxu0 0
    %614 = vmatprep.subr.bf16.mxu0 0
    %615 = vmatpush1.bf16.msra.mxu0 0
    %616 = vmatprep.subr.bf16.mxu0 0
    %617 = vmatpush1.bf16.msra.mxu0 0
    %618 = vmatprep.subr.bf16.mxu0 0
    %619 = vmatpush1.bf16.msra.mxu0 0
    %620 = vmatprep.subr.bf16.mxu0 0
    %621 = vmatpush1.bf16.msra.mxu0 0
    %622 = vmatprep.subr.bf16.mxu0 0
    %623 = vmatpush1.bf16.msra.mxu0 0
    %624 = vmatprep.subr.bf16.mxu0 0
    %625 = vmatpush1.bf16.msra.mxu0 0
    %626 = vmatprep.subr.bf16.mxu0 0
    %627 = vmatpush1.bf16.msra.mxu0 0
    %628 = vmatprep.subr.bf16.mxu0 0
    %629 = vmatpush1.bf16.msra.mxu0 0
    %630 = vmatprep.subr.bf16.mxu0 0
    %631 = vmatpush1.bf16.msra.mxu0 0
    %632 = vmatprep.subr.bf16.mxu0 0
    %633 = vmatpush1.bf16.msra.mxu0 0
    %634 = vmatprep.subr.bf16.mxu0 0
    %635 = vmatpush1.bf16.msra.mxu0 0
    %636 = vmatprep.subr.bf16.mxu0 0
    %637 = vmatpush1.bf16.msra.mxu0 0
    %638 = vmatprep.subr.bf16.mxu0 0
    %639 = vmatpush1.bf16.msra.mxu0 0
    %640 = vmatprep.mubr.bf16.mxu0 0
    %641 = vmatmul.mubr.bf16.gmra.mrb[0].mxu0 %v606
    %v642 = vpop.f32.mrb[0].mxu0
    %v643 = vadd.f32 0.0, %v642
    %v644 = vpop.f32.mrb[0].mxu0
    %v645 = vpop.f32.mrb[0].mxu0
    %v646 = vpop.f32.mrb[0].mxu0
    %647 = vdwg.mxu0
    %v648 = vadd.f32 %v160, %v643
    %v649 = vtanh.pop %v648
    %v650 = vxor.u32 %v648, 2147483648
    %v651 = vmul.f32 %v650, 1.442695
    %v652 = vpow.pop %v651
    %v653 = vadd.f32 %v652, 1.0
    %v654 = vrcp.pop %v653
    %v655 = vmul.f32 1.0, %v654
    %v656 = vsel %vm197, %v649, %v655
    %v657 = vmul.f32 %v656, %v589
    %659 = vrot.lane.b32.xlu0 %v656, 64
    %v660 = vpop.permute.xlu0 %659
    %v662 = vmul.f32 %v656, %v660
    %664 = vrot.lane.b32.xlu0 %v662, 32
    %v665 = vpop.permute.xlu0 %664
    %v667 = vadd.f32 %v657, %v665
    %v668 = vtanh.pop %v667
    %670 = vrot.lane.b32.xlu0 %v668, 64
    %v671 = vpop.permute.xlu0 %670
    %v673 = vmul.f32 %v656, %v671
    %675 = vrot.lane.b32.xlu0 %v673, 64
    %v676 = vpop.permute.xlu0 %675
    %678 = vst.msk [vmem:[#allocation4 + $0x8] sm:$0xff] %vm367, %v676
    %v679 = vpack.c.bf16 %v673, %v673
    %681 = vrot.lane.b32.xlu0 %v679, 32
    %v682 = vpop.permute.xlu0 %681
    %v684 = vsel %vm211, %v682, 0
    %686 = vmatprep.subr.bf16.mxu0 0
    %687 = vmatpush1.bf16.msra.mxu0 %v207
    %688 = vmatprep.subr.bf16.mxu0 0
    %689 = vmatpush1.bf16.msra.mxu0 %v208
    %690 = vmatprep.subr.bf16.mxu0 0
    %691 = vmatpush1.bf16.msra.mxu0 0
    %692 = vmatprep.subr.bf16.mxu0 0
    %693 = vmatpush1.bf16.msra.mxu0 0
    %694 = vmatprep.subr.bf16.mxu0 0
    %695 = vmatpush1.bf16.msra.mxu0 0
    %696 = vmatprep.subr.bf16.mxu0 0
    %697 = vmatpush1.bf16.msra.mxu0 0
    %698 = vmatprep.subr.bf16.mxu0 0
    %699 = vmatpush1.bf16.msra.mxu0 0
    %700 = vmatprep.subr.bf16.mxu0 0
    %701 = vmatpush1.bf16.msra.mxu0 0
    %702 = vmatprep.subr.bf16.mxu0 0
    %703 = vmatpush1.bf16.msra.mxu0 0
    %704 = vmatprep.subr.bf16.mxu0 0
    %705 = vmatpush1.bf16.msra.mxu0 0
    %706 = vmatprep.subr.bf16.mxu0 0
    %707 = vmatpush1.bf16.msra.mxu0 0
    %708 = vmatprep.subr.bf16.mxu0 0
    %709 = vmatpush1.bf16.msra.mxu0 0
    %710 = vmatprep.subr.bf16.mxu0 0
    %711 = vmatpush1.bf16.msra.mxu0 0
    %712 = vmatprep.subr.bf16.mxu0 0
    %713 = vmatpush1.bf16.msra.mxu0 0
    %714 = vmatprep.subr.bf16.mxu0 0
    %715 = vmatpush1.bf16.msra.mxu0 0
    %716 = vmatprep.subr.bf16.mxu0 0
    %717 = vmatpush1.bf16.msra.mxu0 0
    %718 = vmatprep.mubr.bf16.mxu0 0
    %719 = vmatmul.mubr.bf16.gmra.mrb[0].mxu0 %v684
    %v720 = vpop.f32.mrb[0].mxu0
    %v721 = vadd.f32 0.0, %v720
    %v722 = vpop.f32.mrb[0].mxu0
    %v723 = vpop.f32.mrb[0].mxu0
    %v724 = vpop.f32.mrb[0].mxu0
    %725 = vdwg.mxu0
    %v726 = vadd.f32 %v165, %v721
    %v727 = vtanh.pop %v726
    %v728 = vxor.u32 %v726, 2147483648
    %v729 = vmul.f32 %v728, 1.442695
    %v730 = vpow.pop %v729
    %v731 = vadd.f32 %v730, 1.0
    %v732 = vrcp.pop %v731
    %v733 = vmul.f32 1.0, %v732
    %v734 = vsel %vm197, %v727, %v733
    %v735 = vmul.f32 %v734, %v667
    %737 = vrot.lane.b32.xlu0 %v734, 64
    %v738 = vpop.permute.xlu0 %737
    %v740 = vmul.f32 %v734, %v738
    %742 = vrot.lane.b32.xlu0 %v740, 32
    %v743 = vpop.permute.xlu0 %742
    %v745 = vadd.f32 %v735, %v743
    %v746 = vtanh.pop %v745
    %748 = vrot.lane.b32.xlu0 %v746, 64
    %v749 = vpop.permute.xlu0 %748
    %v751 = vmul.f32 %v734, %v749
    %753 = vrot.lane.b32.xlu0 %v751, 96
    %v754 = vpop.permute.xlu0 %753
    %756 = vst.msk [vmem:[#allocation4 + $0x8] sm:$0xff] %vm446, %v754
    %v757 = vpack.c.bf16 %v751, %v751
    %759 = vrot.lane.b32.xlu0 %v757, 32
    %v760 = vpop.permute.xlu0 %759
    %v762 = vsel %vm211, %v760, 0
    %764 = vmatprep.subr.bf16.mxu0 0
    %765 = vmatpush1.bf16.msra.mxu0 %v207
    %766 = vmatprep.subr.bf16.mxu0 0
    %767 = vmatpush1.bf16.msra.mxu0 %v208
    %768 = vmatprep.subr.bf16.mxu0 0
    %769 = vmatpush1.bf16.msra.mxu0 0
    %770 = vmatprep.subr.bf16.mxu0 0
    %771 = vmatpush1.bf16.msra.mxu0 0
    %772 = vmatprep.subr.bf16.mxu0 0
    %773 = vmatpush1.bf16.msra.mxu0 0
    %774 = vmatprep.subr.bf16.mxu0 0
    %775 = vmatpush1.bf16.msra.mxu0 0
    %776 = vmatprep.subr.bf16.mxu0 0
    %777 = vmatpush1.bf16.msra.mxu0 0
    %778 = vmatprep.subr.bf16.mxu0 0
    %779 = vmatpush1.bf16.msra.mxu0 0
    %780 = vmatprep.subr.bf16.mxu0 0
    %781 = vmatpush1.bf16.msra.mxu0 0
    %782 = vmatprep.subr.bf16.mxu0 0
    %783 = vmatpush1.bf16.msra.mxu0 0
    %784 = vmatprep.subr.bf16.mxu0 0
    %785 = vmatpush1.bf16.msra.mxu0 0
    %786 = vmatprep.subr.bf16.mxu0 0
    %787 = vmatpush1.bf16.msra.mxu0 0
    %788 = vmatprep.subr.bf16.mxu0 0
    %789 = vmatpush1.bf16.msra.mxu0 0
    %790 = vmatprep.subr.bf16.mxu0 0
    %791 = vmatpush1.bf16.msra.mxu0 0
    %792 = vmatprep.subr.bf16.mxu0 0
    %793 = vmatpush1.bf16.msra.mxu0 0
    %794 = vmatprep.subr.bf16.mxu0 0
    %795 = vmatpush1.bf16.msra.mxu0 0
    %796 = vmatprep.mubr.bf16.mxu0 0
    %797 = vmatmul.mubr.bf16.gmra.mrb[0].mxu0 %v762
    %v798 = vpop.f32.mrb[0].mxu0
    %v799 = vadd.f32 0.0, %v798
    %v800 = vpop.f32.mrb[0].mxu0
    %v801 = vpop.f32.mrb[0].mxu0
    %v802 = vpop.f32.mrb[0].mxu0
    %803 = vdwg.mxu0
    %v804 = vadd.f32 %v168, %v799
    %v805 = vtanh.pop %v804
    %v806 = vxor.u32 %v804, 2147483648
    %v807 = vmul.f32 %v806, 1.442695
    %v808 = vpow.pop %v807
    %v809 = vadd.f32 %v808, 1.0
    %v810 = vrcp.pop %v809
    %v811 = vmul.f32 1.0, %v810
    %v812 = vsel %vm197, %v805, %v811
    %v813 = vmul.f32 %v812, %v745
    %815 = vrot.lane.b32.xlu0 %v812, 64
    %v816 = vpop.permute.xlu0 %815
    %v818 = vmul.f32 %v812, %v816
    %820 = vrot.lane.b32.xlu0 %v818, 32
    %v821 = vpop.permute.xlu0 %820
    %v823 = vadd.f32 %v813, %v821
    %v824 = vtanh.pop %v823
    %826 = vrot.lane.b32.xlu0 %v824, 64
    %v827 = vpop.permute.xlu0 %826
    %v829 = vmul.f32 %v812, %v827
    %830 = vst.msk [vmem:[#allocation4 + $0x8] sm:$0xff] %vm521, %v829
    %v831 = vpack.c.bf16 %v829, %v829
    %833 = vrot.lane.b32.xlu0 %v831, 32
    %v834 = vpop.permute.xlu0 %833
    %v836 = vsel %vm211, %v834, 0
    %838 = vmatprep.subr.bf16.mxu0 0
    %839 = vmatpush1.bf16.msra.mxu0 %v207
    %840 = vmatprep.subr.bf16.mxu0 0
    %841 = vmatpush1.bf16.msra.mxu0 %v208
    %842 = vmatprep.subr.bf16.mxu0 0
    %843 = vmatpush1.bf16.msra.mxu0 0
    %844 = vmatprep.subr.bf16.mxu0 0
    %845 = vmatpush1.bf16.msra.mxu0 0
    %846 = vmatprep.subr.bf16.mxu0 0
    %847 = vmatpush1.bf16.msra.mxu0 0
    %848 = vmatprep.subr.bf16.mxu0 0
    %849 = vmatpush1.bf16.msra.mxu0 0
    %850 = vmatprep.subr.bf16.mxu0 0
    %851 = vmatpush1.bf16.msra.mxu0 0
    %852 = vmatprep.subr.bf16.mxu0 0
    %853 = vmatpush1.bf16.msra.mxu0 0
    %854 = vmatprep.subr.bf16.mxu0 0
    %855 = vmatpush1.bf16.msra.mxu0 0
    %856 = vmatprep.subr.bf16.mxu0 0
    %857 = vmatpush1.bf16.msra.mxu0 0
    %858 = vmatprep.subr.bf16.mxu0 0
    %859 = vmatpush1.bf16.msra.mxu0 0
    %860 = vmatprep.subr.bf16.mxu0 0
    %861 = vmatpush1.bf16.msra.mxu0 0
    %862 = vmatprep.subr.bf16.mxu0 0
    %863 = vmatpush1.bf16.msra.mxu0 0
    %864 = vmatprep.subr.bf16.mxu0 0
    %865 = vmatpush1.bf16.msra.mxu0 0
    %866 = vmatprep.subr.bf16.mxu0 0
    %867 = vmatpush1.bf16.msra.mxu0 0
    %868 = vmatprep.subr.bf16.mxu0 0
    %869 = vmatpush1.bf16.msra.mxu0 0
    %870 = vmatprep.mubr.bf16.mxu0 0
    %871 = vmatmul.mubr.bf16.gmra.mrb[0].mxu0 %v836
    %v872 = vpop.f32.mrb[0].mxu0
    %v873 = vadd.f32 0.0, %v872
    %v874 = vpop.f32.mrb[0].mxu0
    %v875 = vpop.f32.mrb[0].mxu0
    %v876 = vpop.f32.mrb[0].mxu0
    %877 = vdwg.mxu0
    %v878 = vadd.f32 %v173, %v873
    %v879 = vtanh.pop %v878
    %v880 = vxor.u32 %v878, 2147483648
    %v881 = vmul.f32 %v880, 1.442695
    %v882 = vpow.pop %v881
    %v883 = vadd.f32 %v882, 1.0
    %v884 = vrcp.pop %v883
    %v885 = vmul.f32 1.0, %v884
    %v886 = vsel %vm197, %v879, %v885
    %v887 = vmul.f32 %v886, %v823
    %889 = vrot.lane.b32.xlu0 %v886, 64
    %v890 = vpop.permute.xlu0 %889
    %v892 = vmul.f32 %v886, %v890
    %894 = vrot.lane.b32.xlu0 %v892, 32
    %v895 = vpop.permute.xlu0 %894
    %v897 = vadd.f32 %v887, %v895
    %v898 = vtanh.pop %v897
    %900 = vrot.lane.b32.xlu0 %v898, 64
    %v901 = vpop.permute.xlu0 %900
    %v903 = vmul.f32 %v886, %v901
    %905 = vrot.lane.b32.xlu0 %v903, 32
    %v906 = vpop.permute.xlu0 %905
    %908 = vst.msk [vmem:[#allocation4 + $0x10] sm:$0xff] %vm211, %v906
    %v909 = vpack.c.bf16 %v903, %v903
    %911 = vrot.lane.b32.xlu0 %v909, 32
    %v912 = vpop.permute.xlu0 %911
    %v914 = vsel %vm211, %v912, 0
    %916 = vmatprep.subr.bf16.mxu0 0
    %917 = vmatpush1.bf16.msra.mxu0 %v207
    %918 = vmatprep.subr.bf16.mxu0 0
    %919 = vmatpush1.bf16.msra.mxu0 %v208
    %920 = vmatprep.subr.bf16.mxu0 0
    %921 = vmatpush1.bf16.msra.mxu0 0
    %922 = vmatprep.subr.bf16.mxu0 0
    %923 = vmatpush1.bf16.msra.mxu0 0
    %924 = vmatprep.subr.bf16.mxu0 0
    %925 = vmatpush1.bf16.msra.mxu0 0
    %926 = vmatprep.subr.bf16.mxu0 0
    %927 = vmatpush1.bf16.msra.mxu0 0
    %928 = vmatprep.subr.bf16.mxu0 0
    %929 = vmatpush1.bf16.msra.mxu0 0
    %930 = vmatprep.subr.bf16.mxu0 0
    %931 = vmatpush1.bf16.msra.mxu0 0
    %932 = vmatprep.subr.bf16.mxu0 0
    %933 = vmatpush1.bf16.msra.mxu0 0
    %934 = vmatprep.subr.bf16.mxu0 0
    %935 = vmatpush1.bf16.msra.mxu0 0
    %936 = vmatprep.subr.bf16.mxu0 0
    %937 = vmatpush1.bf16.msra.mxu0 0
    %938 = vmatprep.subr.bf16.mxu0 0
    %939 = vmatpush1.bf16.msra.mxu0 0
    %940 = vmatprep.subr.bf16.mxu0 0
    %941 = vmatpush1.bf16.msra.mxu0 0
    %942 = vmatprep.subr.bf16.mxu0 0
    %943 = vmatpush1.bf16.msra.mxu0 0
    %944 = vmatprep.subr.bf16.mxu0 0
    %945 = vmatpush1.bf16.msra.mxu0 0
    %946 = vmatprep.subr.bf16.mxu0 0
    %947 = vmatpush1.bf16.msra.mxu0 0
    %948 = vmatprep.mubr.bf16.mxu0 0
    %949 = vmatmul.mubr.bf16.gmra.mrb[0].mxu0 %v914
    %v950 = vpop.f32.mrb[0].mxu0
    %v951 = vadd.f32 0.0, %v950
    %v952 = vpop.f32.mrb[0].mxu0
    %v953 = vpop.f32.mrb[0].mxu0
    %v954 = vpop.f32.mrb[0].mxu0
    %955 = vdwg.mxu0
    %v956 = vadd.f32 %v176, %v951
    %v957 = vtanh.pop %v956
    %v958 = vxor.u32 %v956, 2147483648
    %v959 = vmul.f32 %v958, 1.442695
    %v960 = vpow.pop %v959
    %v961 = vadd.f32 %v960, 1.0
    %v962 = vrcp.pop %v961
    %v963 = vmul.f32 1.0, %v962
    %v964 = vsel %vm197, %v957, %v963
    %v965 = vmul.f32 %v964, %v897
    %967 = vrot.lane.b32.xlu0 %v964, 64
    %v968 = vpop.permute.xlu0 %967
    %v970 = vmul.f32 %v964, %v968
    %972 = vrot.lane.b32.xlu0 %v970, 32
    %v973 = vpop.permute.xlu0 %972
    %v975 = vadd.f32 %v965, %v973
    %v976 = vtanh.pop %v975
    %978 = vrot.lane.b32.xlu0 %v976, 64
    %v979 = vpop.permute.xlu0 %978
    %v981 = vmul.f32 %v964, %v979
    %983 = vrot.lane.b32.xlu0 %v981, 64
    %v984 = vpop.permute.xlu0 %983
    %986 = vst.msk [vmem:[#allocation4 + $0x10] sm:$0xff] %vm367, %v984
    %v987 = vpack.c.bf16 %v981, %v981
    %989 = vrot.lane.b32.xlu0 %v987, 32
    %v990 = vpop.permute.xlu0 %989
    %v992 = vsel %vm211, %v990, 0
    %994 = vmatprep.subr.bf16.mxu0 0
    %995 = vmatpush1.bf16.msra.mxu0 %v207
    %996 = vmatprep.subr.bf16.mxu0 0
    %997 = vmatpush1.bf16.msra.mxu0 %v208
    %998 = vmatprep.subr.bf16.mxu0 0
    %999 = vmatpush1.bf16.msra.mxu0 0
    %1000 = vmatprep.subr.bf16.mxu0 0
    %1001 = vmatpush1.bf16.msra.mxu0 0
    %1002 = vmatprep.subr.bf16.mxu0 0
    %1003 = vmatpush1.bf16.msra.mxu0 0
    %1004 = vmatprep.subr.bf16.mxu0 0
    %1005 = vmatpush1.bf16.msra.mxu0 0
    %1006 = vmatprep.subr.bf16.mxu0 0
    %1007 = vmatpush1.bf16.msra.mxu0 0
    %1008 = vmatprep.subr.bf16.mxu0 0
    %1009 = vmatpush1.bf16.msra.mxu0 0
    %1010 = vmatprep.subr.bf16.mxu0 0
    %1011 = vmatpush1.bf16.msra.mxu0 0
    %1012 = vmatprep.subr.bf16.mxu0 0
    %1013 = vmatpush1.bf16.msra.mxu0 0
    %1014 = vmatprep.subr.bf16.mxu0 0
    %1015 = vmatpush1.bf16.msra.mxu0 0
    %1016 = vmatprep.subr.bf16.mxu0 0
    %1017 = vmatpush1.bf16.msra.mxu0 0
    %1018 = vmatprep.subr.bf16.mxu0 0
    %1019 = vmatpush1.bf16.msra.mxu0 0
    %1020 = vmatprep.subr.bf16.mxu0 0
    %1021 = vmatpush1.bf16.msra.mxu0 0
    %1022 = vmatprep.subr.bf16.mxu0 0
    %1023 = vmatpush1.bf16.msra.mxu0 0
    %1024 = vmatprep.subr.bf16.mxu0 0
    %1025 = vmatpush1.bf16.msra.mxu0 0
    %1026 = vmatprep.mubr.bf16.mxu0 0
    %1027 = vmatmul.mubr.bf16.gmra.mrb[0].mxu0 %v992
    %v1028 = vpop.f32.mrb[0].mxu0
    %v1029 = vadd.f32 0.0, %v1028
    %v1030 = vpop.f32.mrb[0].mxu0
    %v1031 = vpop.f32.mrb[0].mxu0
    %v1032 = vpop.f32.mrb[0].mxu0
    %1033 = vdwg.mxu0
    %v1034 = vadd.f32 %v181, %v1029
    %v1035 = vtanh.pop %v1034
    %v1036 = vxor.u32 %v1034, 2147483648
    %v1037 = vmul.f32 %v1036, 1.442695
    %v1038 = vpow.pop %v1037
    %v1039 = vadd.f32 %v1038, 1.0
    %v1040 = vrcp.pop %v1039
    %v1041 = vmul.f32 1.0, %v1040
    %v1042 = vsel %vm197, %v1035, %v1041
    %v1043 = vmul.f32 %v1042, %v975
    %1045 = vrot.lane.b32.xlu0 %v1042, 64
    %v1046 = vpop.permute.xlu0 %1045
    %v1048 = vmul.f32 %v1042, %v1046
    %1050 = vrot.lane.b32.xlu0 %v1048, 32
    %v1051 = vpop.permute.xlu0 %1050
    %v1053 = vadd.f32 %v1043, %v1051
    %v1054 = vtanh.pop %v1053
    %1056 = vrot.lane.b32.xlu0 %v1054, 64
    %v1057 = vpop.permute.xlu0 %1056
    %v1059 = vmul.f32 %v1042, %v1057
    %1061 = vrot.lane.b32.xlu0 %v1059, 96
    %v1062 = vpop.permute.xlu0 %1061
    %1064 = vst.msk [vmem:[#allocation4 + $0x10] sm:$0xff] %vm446, %v1062
    %v1065 = vpack.c.bf16 %v1059, %v1059
    %1067 = vrot.lane.b32.xlu0 %v1065, 32
    %v1068 = vpop.permute.xlu0 %1067
    %v1070 = vsel %vm211, %v1068, 0
    %1072 = vmatprep.subr.bf16.mxu0 0
    %1073 = vmatpush1.bf16.msra.mxu0 %v207
    %1074 = vmatprep.subr.bf16.mxu0 0
    %1075 = vmatpush1.bf16.msra.mxu0 %v208
    %1076 = vmatprep.subr.bf16.mxu0 0
    %1077 = vmatpush1.bf16.msra.mxu0 0
    %1078 = vmatprep.subr.bf16.mxu0 0
    %1079 = vmatpush1.bf16.msra.mxu0 0
    %1080 = vmatprep.subr.bf16.mxu0 0
    %1081 = vmatpush1.bf16.msra.mxu0 0
    %1082 = vmatprep.subr.bf16.mxu0 0
    %1083 = vmatpush1.bf16.msra.mxu0 0
    %1084 = vmatprep.subr.bf16.mxu0 0
    %1085 = vmatpush1.bf16.msra.mxu0 0
    %1086 = vmatprep.subr.bf16.mxu0 0
    %1087 = vmatpush1.bf16.msra.mxu0 0
    %1088 = vmatprep.subr.bf16.mxu0 0
    %1089 = vmatpush1.bf16.msra.mxu0 0
    %1090 = vmatprep.subr.bf16.mxu0 0
    %1091 = vmatpush1.bf16.msra.mxu0 0
    %1092 = vmatprep.subr.bf16.mxu0 0
    %1093 = vmatpush1.bf16.msra.mxu0 0
    %1094 = vmatprep.subr.bf16.mxu0 0
    %1095 = vmatpush1.bf16.msra.mxu0 0
    %1096 = vmatprep.subr.bf16.mxu0 0
    %1097 = vmatpush1.bf16.msra.mxu0 0
    %1098 = vmatprep.subr.bf16.mxu0 0
    %1099 = vmatpush1.bf16.msra.mxu0 0
    %1100 = vmatprep.subr.bf16.mxu0 0
    %1101 = vmatpush1.bf16.msra.mxu0 0
    %1102 = vmatprep.subr.bf16.mxu0 0
    %1103 = vmatpush1.bf16.msra.mxu0 0
    %1104 = vmatprep.mubr.bf16.mxu0 0
    %1105 = vmatmul.mubr.bf16.gmra.mrb[0].mxu0 %v1070
    %v1106 = vpop.f32.mrb[0].mxu0
    %v1107 = vadd.f32 0.0, %v1106
    %v1108 = vpop.f32.mrb[0].mxu0
    %v1109 = vpop.f32.mrb[0].mxu0
    %v1110 = vpop.f32.mrb[0].mxu0
    %1111 = vdwg.mxu0
    %v1112 = vadd.f32 %v184, %v1107
    %v1113 = vtanh.pop %v1112
    %v1114 = vxor.u32 %v1112, 2147483648
    %v1115 = vmul.f32 %v1114, 1.442695
    %v1116 = vpow.pop %v1115
    %v1117 = vadd.f32 %v1116, 1.0
    %v1118 = vrcp.pop %v1117
    %v1119 = vmul.f32 1.0, %v1118
    %v1120 = vsel %vm197, %v1113, %v1119
    %v1121 = vmul.f32 %v1120, %v1053
    %1123 = vrot.lane.b32.xlu0 %v1120, 64
    %v1124 = vpop.permute.xlu0 %1123
    %v1126 = vmul.f32 %v1120, %v1124
    %1128 = vrot.lane.b32.xlu0 %v1126, 32
    %v1129 = vpop.permute.xlu0 %1128
    %v1131 = vadd.f32 %v1121, %v1129
    %v1132 = vtanh.pop %v1131
    %1134 = vrot.lane.b32.xlu0 %v1132, 64
    %v1135 = vpop.permute.xlu0 %1134
    %v1137 = vmul.f32 %v1120, %v1135
    %1138 = vst.msk [vmem:[#allocation4 + $0x10] sm:$0xff] %vm521, %v1137
    %1140 = vrot.lane.b32.xlu0 %v1137, 32
    %v1141 = vpop.permute.xlu0 %1140
    %1143 = vst.msk [vmem:[#allocation2] sm:$0xff] %vm211, %v1141
    %1145 = vrot.lane.b32.xlu0 %v1131, 96
    %v1146 = vpop.permute.xlu0 %1145
    %1148 = vst.msk [vmem:[#allocation3] sm:$0xff] %vm211, %v1146
    // Predicated region
    $region22: #{tpu_custom_call.1} parent=1 // pred_check
      %p1149 = pneg %p23
    $region23: #{tpu_custom_call.1} parent=1 // pred_check_branch
      %1151 = sbr.rel (%p1149) target = $region25
    $region24: #{tpu_custom_call.1} parent=1 // pred_region
      %1152 = vst.msk [vmem:[#allocation6] sm:$0xff] %vm211, %v1141
      %1153 = vst.msk [vmem:[#allocation8] sm:$0xff] %vm211, %v1146
    $region25: #{tpu_custom_call.1} parent=1 // pred_fallthru
      _
    // Predicated region
    $region26: #{tpu_custom_call.1} parent=1 // pred_check
      _
    $region27: #{tpu_custom_call.1} parent=1 // pred_check_branch
      %1155 = sbr.rel (0) target = $region29
    $region28: #{tpu_custom_call.1} parent=1 // pred_region
      %s1157 = ssub.s32 384, 384
      %1158 = vsyncadd [#allocation5], %s1157
      %s1160 = sshll.u32 [#allocation4], 4
      %s1161 = int_to_ptr.vmem [resolvable:$true] %s1160
      %1163 = dma.vmem_to_hbm [thread:$0]  %s1161, 384, %s4, [#allocation5]
    $region29: #{tpu_custom_call.1} parent=1 // pred_fallthru
      _
    // Predicated region
    $region30: #{tpu_custom_call.1} parent=1 // pred_check
      _
    $region31: #{tpu_custom_call.1} parent=1 // pred_check_branch
      %1165 = sbr.rel (0) target = $region33
    $region32: #{tpu_custom_call.1} parent=1 // pred_region
      %s1167 = ssub.s32 128, 128
      %1168 = vsyncadd [#allocation7], %s1167
      %s1170 = sshll.u32 [#allocation6], 4
      %s1171 = int_to_ptr.vmem [resolvable:$true] %s1170
      %1173 = dma.vmem_to_hbm [thread:$0]  %s1171, 128, %s5, [#allocation7]
    $region33: #{tpu_custom_call.1} parent=1 // pred_fallthru
      _
    // Predicated region
    $region34: #{tpu_custom_call.1} parent=1 // pred_check
      _
    $region35: #{tpu_custom_call.1} parent=1 // pred_check_branch
      %1175 = sbr.rel (0) target = $region37
    $region36: #{tpu_custom_call.1} parent=1 // pred_region
      %s1177 = ssub.s32 128, 128
      %1178 = vsyncadd [#allocation7], %s1177
      %s1180 = sshll.u32 [#allocation8], 4
      %s1181 = int_to_ptr.vmem [resolvable:$true] %s1180
      %1183 = dma.vmem_to_hbm [thread:$0]  %s1181, 128, %s6, [#allocation7]
    $region37: #{tpu_custom_call.1} parent=1 // pred_fallthru
      _
    // Predicated region
    $region38: #{tpu_custom_call.1} parent=1 // pred_check
      _
    $region39: #{tpu_custom_call.1} parent=1 // pred_check_branch
      %1185 = sbr.rel (0) target = $region41
    $region40: #{tpu_custom_call.1} parent=1 // pred_region
      %1186 = dma.done [#allocation5], 384
    $region41: #{tpu_custom_call.1} parent=1 // pred_fallthru
      _
    // Predicated region
    $region42: #{tpu_custom_call.1} parent=1 // pred_check
      _
    $region43: #{tpu_custom_call.1} parent=1 // pred_check_branch
      %1188 = sbr.rel (0) target = $region45
    $region44: #{tpu_custom_call.1} parent=1 // pred_region
      %1189 = dma.done [#allocation7], 128
    $region45: #{tpu_custom_call.1} parent=1 // pred_fallthru
      _
    // Predicated region
    $region46: #{tpu_custom_call.1} parent=1 // pred_check
      _
    $region47: #{tpu_custom_call.1} parent=1 // pred_check_branch
      %1191 = sbr.rel (0) target = $region49
    $region48: #{tpu_custom_call.1} parent=1 // pred_region
      %1192 = dma.done [#allocation7], 128
    $region49: #{tpu_custom_call.1} parent=1 // pred_fallthru
      _
    %1193 = vsyncpa [#allocation5], 1
    %1194 = vsyncpa [#allocation7], 1

</llo_original>
